<compile_context>
chip_gen: v6e
topology: v6e:2x2x1
jax: 0.10.0
libtpu: 0.0.40
codegen_flags: <defaults>
</compile_context>

<pallas_src>
import functools

import jax
import jax.numpy as jnp
from jax.experimental import pallas as pl
from jax.experimental.pallas import tpu as pltpu

IN_FEATURES = 28 * 28      # 784 (flattened input width, kept unpadded)
HID = 512
OUT_FEATURES = 10
N_PAD = 128                # padded logits width (lane-dense output)
_MIN_SPLIT = 256           # split into >=2 tiles (v7x megacore) once B >= 2*this


def _round_up(x, m):
    return ((x + m - 1) // m) * m


def _choose_tiles(B, block_b):
    """Balanced batch tiling: minimizes padding waste; even tile count for v7x."""
    n_tiles = max(1, -(-B // block_b))
    if n_tiles == 1 and B >= 2 * _MIN_SPLIT:
        n_tiles = 2                       # enough work -> use both v7x TCs
    elif n_tiles > 1 and n_tiles % 2 == 1:
        n_tiles += 1                      # keep TC load balanced
    tb = _round_up(-(-B // n_tiles), 16)  # multiple of 16: bf16 sublane packing
    return n_tiles, tb


def mlp_kernel(x_ref, w1_ref, b1_ref, w2_ref, b2_ref, w3_ref, b3_ref, o_ref):
    # One batch tile per grid step; all three matmuls fused. bf16 MXU inputs,
    # f32 accumulation, f32 bias/ReLU on the VPU.
    x = x_ref[...]                                            # already bf16
    h1 = jnp.dot(x, w1_ref[...], preferred_element_type=jnp.float32) + b1_ref[...]
    h1 = jnp.maximum(h1, 0.0)
    h2 = jnp.dot(h1.astype(jnp.bfloat16), w2_ref[...],
                 preferred_element_type=jnp.float32) + b2_ref[...]
    h2 = jnp.maximum(h2, 0.0)
    logits = jnp.dot(h2.astype(jnp.bfloat16), w3_ref[...],
                     preferred_element_type=jnp.float32) + b3_ref[...]
    o_ref[...] = logits.astype(o_ref.dtype)


@functools.partial(jax.jit, static_argnames=("block_b",))
def mymodel_forward(x, kernel_params, *, block_b=1024):
    """x: [B, 1, 28, 28] (or [B, 28, 28]) float32. Returns [B, 10] f32 logits.

    kernel_params: output of prepare_params() (bf16 weights, padded W3/b3)."""
    w1, b1, w2, b2, w3, b3 = kernel_params
    B = x.shape[0]
    # nn.Flatten + bf16 cast fused into a single producer (halves x HBM bytes).
    x_flat = x.reshape(B, -1).astype(jnp.bfloat16)            # [B, 784]

    n_tiles, tb = _choose_tiles(B, block_b)
    b_pad = n_tiles * tb
    if b_pad != B:
        x_flat = jnp.pad(x_flat, ((0, b_pad - B), (0, 0)))
    grid = (n_tiles,)

    cost = pl.CostEstimate(
        flops=2 * b_pad * (IN_FEATURES * HID + HID * HID + HID * N_PAD),
        transcendentals=0,
        bytes_accessed=(x_flat.size * 2 + b_pad * N_PAD * 4
                        + (w1.size + w2.size + w3.size) * 2
                        + (b1.size + b2.size + b3.size) * 4),
    )

    out = pl.pallas_call(
        mlp_kernel,
        out_shape=jax.ShapeDtypeStruct((b_pad, N_PAD), jnp.float32),
        grid=grid,
        in_specs=[
            pl.BlockSpec((tb, IN_FEATURES), lambda i: (i, 0)),    # x tile (pipelined)
            pl.BlockSpec((IN_FEATURES, HID), lambda i: (0, 0)),   # W1 (VMEM-resident)
            pl.BlockSpec((1, HID), lambda i: (0, 0)),             # b1
            pl.BlockSpec((HID, HID), lambda i: (0, 0)),           # W2
            pl.BlockSpec((1, HID), lambda i: (0, 0)),             # b2
            pl.BlockSpec((HID, N_PAD), lambda i: (0, 0)),         # W3 (N padded to 128)
            pl.BlockSpec((1, N_PAD), lambda i: (0, 0)),           # b3
        ],
        out_specs=pl.BlockSpec((tb, N_PAD), lambda i: (i, 0)),
        compiler_params=pltpu.CompilerParams(
            dimension_semantics=("parallel",),
            vmem_limit_bytes=48 * 1024 * 1024,
        ),
        cost_estimate=cost,
    )(x_flat, w1, b1, w2, b2, w3, b3)

    return out[:B, :OUT_FEATURES]


def init_params(key):
    """f32 params, [in, out] weight layout (transpose of PyTorch), biases [1, out].
    Matches nn.Linear default init U[-1/sqrt(fan_in), 1/sqrt(fan_in)]."""
    dims = [(IN_FEATURES, HID), (HID, HID), (HID, OUT_FEATURES)]
    params = []
    for fan_in, fan_out in dims:
        kw, kb, key = jax.random.split(key, 3)
        bound = 1.0 / jnp.sqrt(fan_in)
        w = jax.random.uniform(kw, (fan_in, fan_out), jnp.float32, -bound, bound)
        b = jax.random.uniform(kb, (1, fan_out), jnp.float32, -bound, bound)
        params.extend([w, b])
    return tuple(params)


def prepare_params(params_f32):
    """Cast weights to bf16; zero-pad W3/b3 N: 10 -> 128 (mathematically inert).
    W1 stays at its natural 784x512 shape (no K padding)."""
    w1, b1, w2, b2, w3, b3 = params_f32
    w3p = jnp.zeros((HID, N_PAD), jnp.bfloat16).at[:, :OUT_FEATURES].set(
        w3.astype(jnp.bfloat16))
    b3p = jnp.zeros((1, N_PAD), jnp.float32).at[:, :OUT_FEATURES].set(b3)
    return (w1.astype(jnp.bfloat16), b1.astype(jnp.float32),
            w2.astype(jnp.bfloat16), b2.astype(jnp.float32),
            w3p, b3p)


def reference_forward(x, params_f32):
    """Plain-JAX reference mimicking the kernel's bf16-input / f32-accumulate
    matmuls (bf16*bf16 products are exact when accumulated in f32)."""
    w1, b1, w2, b2, w3, b3 = params_f32
    bf = lambda a: a.astype(jnp.bfloat16).astype(jnp.float32)
    xf = x.reshape(x.shape[0], -1).astype(jnp.float32)
    dot = functools.partial(jnp.dot, precision=jax.lax.Precision.HIGHEST)
    h1 = jnp.maximum(dot(bf(xf), bf(w1)) + b1, 0.0)
    h2 = jnp.maximum(dot(bf(h1), bf(w2)) + b2, 0.0)
    return dot(bf(h2), bf(w3)) + b3


if __name__ == "__main__":
    key = jax.random.PRNGKey(0)
    kx, kp = jax.random.split(key)

    B = 2
    x = jax.random.normal(kx, (B, 1, 28, 28), jnp.float32)
    params_f32 = init_params(kp)
    kernel_params = prepare_params(params_f32)

    logits = mymodel_forward(x, kernel_params)
    logits = jax.block_until_ready(logits)

    ref = reference_forward(x, params_f32)
    assert logits.shape == (B, OUT_FEATURES)
    assert jnp.allclose(logits, ref, atol=1e-2, rtol=1e-2), (
        float(jnp.max(jnp.abs(logits - ref))))

    print("KERNEL_OK")
</pallas_src>

<mosaic_0001>
module attributes {stable_mosaic.version = 11 : i64} {
  func.func @mlp_kernel(%arg0: i32, %arg1: memref<16x784xbf16, #tpu.memory_space<vmem>>, %arg2: memref<784x512xbf16, #tpu.memory_space<vmem>>, %arg3: memref<1x512xf32, #tpu.memory_space<vmem>>, %arg4: memref<512x512xbf16, #tpu.memory_space<vmem>>, %arg5: memref<1x512xf32, #tpu.memory_space<vmem>>, %arg6: memref<512x128xbf16, #tpu.memory_space<vmem>>, %arg7: memref<1x128xf32, #tpu.memory_space<vmem>>, %arg8: memref<16x128xf32, #tpu.memory_space<vmem>>) attributes {dimension_semantics = [#tpu.dimension_semantics<parallel>], iteration_bounds = array<i64: 1>, scalar_prefetch = 0 : i64, scratch_operands = 0 : i64, tpu.core_type = #tpu.core_type<tc>, window_params = [{transform_indices = @transform_0, window_bounds = array<i64: 16, 784>}, {pipeline_mode = #tpu.pipeline_mode<synchronous>, transform_indices = @transform_1, window_bounds = array<i64: 784, 512>}, {pipeline_mode = #tpu.pipeline_mode<synchronous>, transform_indices = @transform_2, window_bounds = array<i64: 1, 512>}, {pipeline_mode = #tpu.pipeline_mode<synchronous>, transform_indices = @transform_3, window_bounds = array<i64: 512, 512>}, {pipeline_mode = #tpu.pipeline_mode<synchronous>, transform_indices = @transform_4, window_bounds = array<i64: 1, 512>}, {pipeline_mode = #tpu.pipeline_mode<synchronous>, transform_indices = @transform_5, window_bounds = array<i64: 512, 128>}, {pipeline_mode = #tpu.pipeline_mode<synchronous>, transform_indices = @transform_6, window_bounds = array<i64: 1, 128>}, {transform_indices = @transform_7, window_bounds = array<i64: 16, 128>}]} {
    %c0 = arith.constant 0 : index
    %c0_0 = arith.constant 0 : index
    %0 = vector.load %arg1[%c0, %c0_0] : memref<16x784xbf16, #tpu.memory_space<vmem>>, vector<16x784xbf16>
    %c0_1 = arith.constant 0 : index
    %c0_2 = arith.constant 0 : index
    %1 = vector.load %arg2[%c0_1, %c0_2] : memref<784x512xbf16, #tpu.memory_space<vmem>>, vector<784x512xbf16>
    %cst = arith.constant dense<0.000000e+00> : vector<16x512xf32>
    %2 = tpu.matmul %0, %1, %cst {dimension_numbers = #tpu.dot_dimension_numbers<[1], [0], [0], [1], [0, 0, 1, 1], [], []>} : vector<16x784xbf16>, vector<784x512xbf16>, vector<16x512xf32> -> vector<16x512xf32>
    %c0_3 = arith.constant 0 : index
    %c0_4 = arith.constant 0 : index
    %3 = vector.load %arg3[%c0_3, %c0_4] : memref<1x512xf32, #tpu.memory_space<vmem>>, vector<1x512xf32>
    %4 = vector.broadcast %3 : vector<1x512xf32> to vector<16x512xf32>
    %5 = arith.addf %2, %4 : vector<16x512xf32>
    %cst_5 = arith.constant 0.000000e+00 : f32
    %6 = vector.broadcast %cst_5 : f32 to vector<16x512xf32>
    %7 = arith.maximumf %5, %6 : vector<16x512xf32>
    %8 = arith.truncf %7 : vector<16x512xf32> to vector<16x512xbf16>
    %c0_6 = arith.constant 0 : index
    %c0_7 = arith.constant 0 : index
    %9 = vector.load %arg4[%c0_6, %c0_7] : memref<512x512xbf16, #tpu.memory_space<vmem>>, vector<512x512xbf16>
    %cst_8 = arith.constant dense<0.000000e+00> : vector<16x512xf32>
    %10 = tpu.matmul %8, %9, %cst_8 {dimension_numbers = #tpu.dot_dimension_numbers<[1], [0], [0], [1], [0, 0, 1, 1], [], []>} : vector<16x512xbf16>, vector<512x512xbf16>, vector<16x512xf32> -> vector<16x512xf32>
    %c0_9 = arith.constant 0 : index
    %c0_10 = arith.constant 0 : index
    %11 = vector.load %arg5[%c0_9, %c0_10] : memref<1x512xf32, #tpu.memory_space<vmem>>, vector<1x512xf32>
    %12 = vector.broadcast %11 : vector<1x512xf32> to vector<16x512xf32>
    %13 = arith.addf %10, %12 : vector<16x512xf32>
    %cst_11 = arith.constant 0.000000e+00 : f32
    %14 = vector.broadcast %cst_11 : f32 to vector<16x512xf32>
    %15 = arith.maximumf %13, %14 : vector<16x512xf32>
    %16 = arith.truncf %15 : vector<16x512xf32> to vector<16x512xbf16>
    %c0_12 = arith.constant 0 : index
    %c0_13 = arith.constant 0 : index
    %17 = vector.load %arg6[%c0_12, %c0_13] : memref<512x128xbf16, #tpu.memory_space<vmem>>, vector<512x128xbf16>
    %cst_14 = arith.constant dense<0.000000e+00> : vector<16x128xf32>
    %18 = tpu.matmul %16, %17, %cst_14 {dimension_numbers = #tpu.dot_dimension_numbers<[1], [0], [0], [1], [0, 0, 1, 1], [], []>} : vector<16x512xbf16>, vector<512x128xbf16>, vector<16x128xf32> -> vector<16x128xf32>
    %c0_15 = arith.constant 0 : index
    %c0_16 = arith.constant 0 : index
    %19 = vector.load %arg7[%c0_15, %c0_16] : memref<1x128xf32, #tpu.memory_space<vmem>>, vector<1x128xf32>
    %20 = vector.broadcast %19 : vector<1x128xf32> to vector<16x128xf32>
    %21 = arith.addf %18, %20 : vector<16x128xf32>
    %c0_17 = arith.constant 0 : index
    %c0_18 = arith.constant 0 : index
    %22 = vector.load %arg8[%c0_17, %c0_18] : memref<16x128xf32, #tpu.memory_space<vmem>>, vector<16x128xf32>
    tpu.vector_store %arg8[%c0_17, %c0_18], %21 {strides = array<i32>} : memref<16x128xf32, #tpu.memory_space<vmem>>, vector<16x128xf32>,
    return
  }
  func.func @transform_0(%arg0: i32) -> (i32, i32) {
    %c0_i32 = arith.constant 0 : i32
    %c0_i32_0 = arith.constant 0 : i32
    return %arg0, %c0_i32 : i32, i32
  }
  func.func @transform_1(%arg0: i32) -> (i32, i32) {
    %c0_i32 = arith.constant 0 : i32
    %c0_i32_0 = arith.constant 0 : i32
    %c0_i32_1 = arith.constant 0 : i32
    return %c0_i32, %c0_i32_0 : i32, i32
  }
  func.func @transform_2(%arg0: i32) -> (i32, i32) {
    %c0_i32 = arith.constant 0 : i32
    %c0_i32_0 = arith.constant 0 : i32
    %c0_i32_1 = arith.constant 0 : i32
    return %c0_i32, %c0_i32_0 : i32, i32
  }
  func.func @transform_3(%arg0: i32) -> (i32, i32) {
    %c0_i32 = arith.constant 0 : i32
    %c0_i32_0 = arith.constant 0 : i32
    %c0_i32_1 = arith.constant 0 : i32
    return %c0_i32, %c0_i32_0 : i32, i32
  }
  func.func @transform_4(%arg0: i32) -> (i32, i32) {
    %c0_i32 = arith.constant 0 : i32
    %c0_i32_0 = arith.constant 0 : i32
    %c0_i32_1 = arith.constant 0 : i32
    return %c0_i32, %c0_i32_0 : i32, i32
  }
  func.func @transform_5(%arg0: i32) -> (i32, i32) {
    %c0_i32 = arith.constant 0 : i32
    %c0_i32_0 = arith.constant 0 : i32
    %c0_i32_1 = arith.constant 0 : i32
    return %c0_i32, %c0_i32_0 : i32, i32
  }
  func.func @transform_6(%arg0: i32) -> (i32, i32) {
    %c0_i32 = arith.constant 0 : i32
    %c0_i32_0 = arith.constant 0 : i32
    %c0_i32_1 = arith.constant 0 : i32
    return %c0_i32, %c0_i32_0 : i32, i32
  }
  func.func @transform_7(%arg0: i32) -> (i32, i32) {
    %c0_i32 = arith.constant 0 : i32
    %c0_i32_0 = arith.constant 0 : i32
    return %arg0, %c0_i32 : i32, i32
  }
}

</mosaic_0001>

<llo_original>
// kernel: mymodel_forward.1
$region0: #{mymodel_forward.1}
  #allocation0 [shape = 'u32[]', space=smem, size = 0x4, offset = 0x4, fixed_abs, tag = 'smem constant byte address 0x4 - core index']
  #allocation1 [shape = 'u32[144,128]{1,0:T(1,128)}', space=vmem, size = 0x12000, scoped, tag = 'internal scratch']
  %s0 = inlined_call_operand.vmem [shape: bf16[16,784], index: 0, kind: input, shape index: {}]
  %s1 = inlined_call_operand.hbm [shape: bf16[784,512], index: 1, kind: input, shape index: {}]
  %s2 = inlined_call_operand.vmem [shape: f32[1,512], index: 2, kind: input, shape index: {}]
  %s3 = inlined_call_operand.hbm [shape: bf16[512,512], index: 3, kind: input, shape index: {}]
  %s4 = inlined_call_operand.vmem [shape: f32[1,512], index: 4, kind: input, shape index: {}]
  %s5 = inlined_call_operand.hbm [shape: bf16[512,128], index: 5, kind: input, shape index: {}]
  %s6 = inlined_call_operand.vmem [shape: f32[1,128], index: 6, kind: input, shape index: {}]
  %s7 = inlined_call_operand.vmem [shape: f32[16,128], index: 7, kind: output, shape index: {}]
  %s8 = sld [smem:[#allocation0]]
  $region50: #{mymodel_forward.1} parent=0
    _
  %s10 = ssub.s32 1, %s8
  %s11 = scalar_select 0, %s10, %s8
  $region1: #{mymodel_forward.1} parent=0
    #allocation2 [shape = 'u8[802816]{0}', space=vmem, size = 0xc4000, scoped, tag = 'input window, operand 1, single buffered']
    #allocation3 [shape = 's32[1]{0}', space=sflag, size = 0x4, scoped, tag = 'scoped memory for mymodel_forward.1']
    #allocation4 [shape = 'u8[524288]{0}', space=vmem, size = 0x80000, scoped, tag = 'input window, operand 3, single buffered']
    #allocation5 [shape = 's32[1]{0}', space=sflag, size = 0x4, scoped, tag = 'scoped memory for mymodel_forward.1']
    #allocation6 [shape = 'u8[131072]{0}', space=vmem, size = 0x20000, scoped, tag = 'input window, operand 5, single buffered']
    %12 = vsyncpa [#allocation3], 0
    %13 = vsyncpa [#allocation5], 0
    // Predicated region
    $region2: #{mymodel_forward.1} parent=1 // pred_check
      _
    $region3: #{mymodel_forward.1} parent=1 // pred_check_branch
      %15 = sbr.rel (0) target = $region5
    $region4: #{mymodel_forward.1} parent=1 // pred_region
      _
    $region5: #{mymodel_forward.1} parent=1 // pred_fallthru
      _
    // Predicated region
    $region6: #{mymodel_forward.1} parent=1 // pred_check
      _
    $region7: #{mymodel_forward.1} parent=1 // pred_check_branch
      %17 = sbr.rel (0) target = $region9
    $region8: #{mymodel_forward.1} parent=1 // pred_region
      %s19 = ssub.s32 25088, 25088
      %20 = vsyncadd [#allocation3], %s19
      %s21 = sshll.u32 [#allocation2], 4
      %s22 = int_to_ptr.vmem [resolvable:$true] %s21
      %27 = dma.hbm_to_vmem [thread:$0]  %s1, 25088, %s22, [#allocation3], 256, 256, 16
    $region9: #{mymodel_forward.1} parent=1 // pred_fallthru
      _
    // Predicated region
    $region10: #{mymodel_forward.1} parent=1 // pred_check
      _
    $region11: #{mymodel_forward.1} parent=1 // pred_check_branch
      %29 = sbr.rel (0) target = $region13
    $region12: #{mymodel_forward.1} parent=1 // pred_region
      _
    $region13: #{mymodel_forward.1} parent=1 // pred_fallthru
      _
    // Predicated region
    $region14: #{mymodel_forward.1} parent=1 // pred_check
      _
    $region15: #{mymodel_forward.1} parent=1 // pred_check_branch
      %31 = sbr.rel (0) target = $region17
    $region16: #{mymodel_forward.1} parent=1 // pred_region
      %s33 = ssub.s32 16384, 16384
      %34 = vsyncadd [#allocation5], %s33
      %s35 = sshll.u32 [#allocation4], 4
      %s36 = int_to_ptr.vmem [resolvable:$true] %s35
      %41 = dma.hbm_to_vmem [thread:$0]  %s3, 16384, %s36, [#allocation5], 256, 256, 16
    $region17: #{mymodel_forward.1} parent=1 // pred_fallthru
      _
    // Predicated region
    $region18: #{mymodel_forward.1} parent=1 // pred_check
      _
    $region19: #{mymodel_forward.1} parent=1 // pred_check_branch
      %43 = sbr.rel (0) target = $region21
    $region20: #{mymodel_forward.1} parent=1 // pred_region
      _
    $region21: #{mymodel_forward.1} parent=1 // pred_fallthru
      _
    // Predicated region
    $region22: #{mymodel_forward.1} parent=1 // pred_check
      _
    $region23: #{mymodel_forward.1} parent=1 // pred_check_branch
      %45 = sbr.rel (0) target = $region25
    $region24: #{mymodel_forward.1} parent=1 // pred_region
      %s47 = ssub.s32 4096, 4096
      %48 = vsyncadd [#allocation5], %s47
      %s49 = sshll.u32 [#allocation6], 4
      %s50 = int_to_ptr.vmem [resolvable:$true] %s49
      %55 = dma.hbm_to_vmem [thread:$0]  %s5, 4096, %s50, [#allocation5], 64, 64, 4
    $region25: #{mymodel_forward.1} parent=1 // pred_fallthru
      _
    // Predicated region
    $region26: #{mymodel_forward.1} parent=1 // pred_check
      _
    $region27: #{mymodel_forward.1} parent=1 // pred_check_branch
      %57 = sbr.rel (0) target = $region29
    $region28: #{mymodel_forward.1} parent=1 // pred_region
      _
    $region29: #{mymodel_forward.1} parent=1 // pred_fallthru
      _
    // Predicated region
    $region30: #{mymodel_forward.1} parent=1 // pred_check
      _
    $region31: #{mymodel_forward.1} parent=1 // pred_check_branch
      %59 = sbr.rel (0) target = $region33
    $region32: #{mymodel_forward.1} parent=1 // pred_region
      %60 = dma.done [#allocation3], 25088
    $region33: #{mymodel_forward.1} parent=1 // pred_fallthru
      _
    // Predicated region
    $region34: #{mymodel_forward.1} parent=1 // pred_check
      _
    $region35: #{mymodel_forward.1} parent=1 // pred_check_branch
      %62 = sbr.rel (0) target = $region37
    $region36: #{mymodel_forward.1} parent=1 // pred_region
      %63 = dma.done [#allocation5], 16384
    $region37: #{mymodel_forward.1} parent=1 // pred_fallthru
      _
    // Predicated region
    $region38: #{mymodel_forward.1} parent=1 // pred_check
      _
    $region39: #{mymodel_forward.1} parent=1 // pred_check_branch
      %65 = sbr.rel (0) target = $region41
    $region40: #{mymodel_forward.1} parent=1 // pred_region
      %66 = dma.done [#allocation5], 4096
    $region41: #{mymodel_forward.1} parent=1 // pred_fallthru
      _
    %v68 = vld [vmem:[%s0] sm:$0xff]
    %v69 = vld [vmem:[%s0 + $0x8] sm:$0xff]
    %v70 = vld [vmem:[%s0 + $0x10] sm:$0xff]
    %v71 = vld [vmem:[%s0 + $0x18] sm:$0xf]
    %v72 = vld [vmem:[%s0 + $0x1c] sm:$0xff]
    %v73 = vld [vmem:[%s0 + $0x24] sm:$0xff]
    %v74 = vld [vmem:[%s0 + $0x2c] sm:$0xff]
    %v75 = vld [vmem:[%s0 + $0x34] sm:$0xf]
    %v76 = vld [vmem:[#allocation2] sm:$0xff]
    %v77 = vld [vmem:[#allocation2 + $0x8] sm:$0xff]
    %v78 = vld [vmem:[#allocation2 + $0x10] sm:$0xff]
    %v79 = vld [vmem:[#allocation2 + $0x18] sm:$0xff]
    %v80 = vld [vmem:[#allocation2 + $0x20] sm:$0xff]
    %v81 = vld [vmem:[#allocation2 + $0x28] sm:$0xff]
    %v82 = vld [vmem:[#allocation2 + $0x30] sm:$0xff]
    %v83 = vld [vmem:[#allocation2 + $0x38] sm:$0xff]
    %v84 = vld [vmem:[#allocation2 + $0x40] sm:$0xff]
    %v85 = vld [vmem:[#allocation2 + $0x48] sm:$0xff]
    %v86 = vld [vmem:[#allocation2 + $0x50] sm:$0xff]
    %v87 = vld [vmem:[#allocation2 + $0x58] sm:$0xff]
    %v88 = vld [vmem:[#allocation2 + $0x60] sm:$0xff]
    %v89 = vld [vmem:[#allocation2 + $0x68] sm:$0xff]
    %v90 = vld [vmem:[#allocation2 + $0x70] sm:$0xff]
    %v91 = vld [vmem:[#allocation2 + $0x78] sm:$0xff]
    %v92 = vld [vmem:[#allocation2 + $0x80] sm:$0xff]
    %v93 = vld [vmem:[#allocation2 + $0x88] sm:$0xff]
    %v94 = vld [vmem:[#allocation2 + $0x90] sm:$0xff]
    %v95 = vld [vmem:[#allocation2 + $0x98] sm:$0xff]
    %v96 = vld [vmem:[#allocation2 + $0xa0] sm:$0xff]
    %v97 = vld [vmem:[#allocation2 + $0xa8] sm:$0xff]
    %v98 = vld [vmem:[#allocation2 + $0xb0] sm:$0xff]
    %v99 = vld [vmem:[#allocation2 + $0xb8] sm:$0xff]
    %v100 = vld [vmem:[#allocation2 + $0xc0] sm:$0xff]
    %v101 = vld [vmem:[#allocation2 + $0xc8] sm:$0xff]
    %v102 = vld [vmem:[#allocation2 + $0xd0] sm:$0xff]
    %v103 = vld [vmem:[#allocation2 + $0xd8] sm:$0xff]
    %v104 = vld [vmem:[#allocation2 + $0xe0] sm:$0xff]
    %v105 = vld [vmem:[#allocation2 + $0xe8] sm:$0xff]
    %v106 = vld [vmem:[#allocation2 + $0xf0] sm:$0xff]
    %v107 = vld [vmem:[#allocation2 + $0xf8] sm:$0xff]
    %v108 = vld [vmem:[#allocation2 + $0x100] sm:$0xff]
    %v109 = vld [vmem:[#allocation2 + $0x108] sm:$0xff]
    %v110 = vld [vmem:[#allocation2 + $0x110] sm:$0xff]
    %v111 = vld [vmem:[#allocation2 + $0x118] sm:$0xff]
    %v112 = vld [vmem:[#allocation2 + $0x120] sm:$0xff]
    %v113 = vld [vmem:[#allocation2 + $0x128] sm:$0xff]
    %v114 = vld [vmem:[#allocation2 + $0x130] sm:$0xff]
    %v115 = vld [vmem:[#allocation2 + $0x138] sm:$0xff]
    %v116 = vld [vmem:[#allocation2 + $0x140] sm:$0xff]
    %v117 = vld [vmem:[#allocation2 + $0x148] sm:$0xff]
    %v118 = vld [vmem:[#allocation2 + $0x150] sm:$0xff]
    %v119 = vld [vmem:[#allocation2 + $0x158] sm:$0xff]
    %v120 = vld [vmem:[#allocation2 + $0x160] sm:$0xff]
    %v121 = vld [vmem:[#allocation2 + $0x168] sm:$0xff]
    %v122 = vld [vmem:[#allocation2 + $0x170] sm:$0xff]
    %v123 = vld [vmem:[#allocation2 + $0x178] sm:$0xff]
    %v124 = vld [vmem:[#allocation2 + $0x180] sm:$0xff]
    %v125 = vld [vmem:[#allocation2 + $0x188] sm:$0xff]
    %v126 = vld [vmem:[#allocation2 + $0x190] sm:$0xff]
    %v127 = vld [vmem:[#allocation2 + $0x198] sm:$0xff]
    %v128 = vld [vmem:[#allocation2 + $0x1a0] sm:$0xff]
    %v129 = vld [vmem:[#allocation2 + $0x1a8] sm:$0xff]
    %v130 = vld [vmem:[#allocation2 + $0x1b0] sm:$0xff]
    %v131 = vld [vmem:[#allocation2 + $0x1b8] sm:$0xff]
    %v132 = vld [vmem:[#allocation2 + $0x1c0] sm:$0xff]
    %v133 = vld [vmem:[#allocation2 + $0x1c8] sm:$0xff]
    %v134 = vld [vmem:[#allocation2 + $0x1d0] sm:$0xff]
    %v135 = vld [vmem:[#allocation2 + $0x1d8] sm:$0xff]
    %v136 = vld [vmem:[#allocation2 + $0x1e0] sm:$0xff]
    %v137 = vld [vmem:[#allocation2 + $0x1e8] sm:$0xff]
    %v138 = vld [vmem:[#allocation2 + $0x1f0] sm:$0xff]
    %v139 = vld [vmem:[#allocation2 + $0x1f8] sm:$0xff]
    %v140 = vld [vmem:[#allocation2 + $0x200] sm:$0xff]
    %v141 = vld [vmem:[#allocation2 + $0x208] sm:$0xff]
    %v142 = vld [vmem:[#allocation2 + $0x210] sm:$0xff]
    %v143 = vld [vmem:[#allocation2 + $0x218] sm:$0xff]
    %v144 = vld [vmem:[#allocation2 + $0x220] sm:$0xff]
    %v145 = vld [vmem:[#allocation2 + $0x228] sm:$0xff]
    %v146 = vld [vmem:[#allocation2 + $0x230] sm:$0xff]
    %v147 = vld [vmem:[#allocation2 + $0x238] sm:$0xff]
    %v148 = vld [vmem:[#allocation2 + $0x240] sm:$0xff]
    %v149 = vld [vmem:[#allocation2 + $0x248] sm:$0xff]
    %v150 = vld [vmem:[#allocation2 + $0x250] sm:$0xff]
    %v151 = vld [vmem:[#allocation2 + $0x258] sm:$0xff]
    %v152 = vld [vmem:[#allocation2 + $0x260] sm:$0xff]
    %v153 = vld [vmem:[#allocation2 + $0x268] sm:$0xff]
    %v154 = vld [vmem:[#allocation2 + $0x270] sm:$0xff]
    %v155 = vld [vmem:[#allocation2 + $0x278] sm:$0xff]
    %v156 = vld [vmem:[#allocation2 + $0x280] sm:$0xff]
    %v157 = vld [vmem:[#allocation2 + $0x288] sm:$0xff]
    %v158 = vld [vmem:[#allocation2 + $0x290] sm:$0xff]
    %v159 = vld [vmem:[#allocation2 + $0x298] sm:$0xff]
    %v160 = vld [vmem:[#allocation2 + $0x2a0] sm:$0xff]
    %v161 = vld [vmem:[#allocation2 + $0x2a8] sm:$0xff]
    %v162 = vld [vmem:[#allocation2 + $0x2b0] sm:$0xff]
    %v163 = vld [vmem:[#allocation2 + $0x2b8] sm:$0xff]
    %v164 = vld [vmem:[#allocation2 + $0x2c0] sm:$0xff]
    %v165 = vld [vmem:[#allocation2 + $0x2c8] sm:$0xff]
    %v166 = vld [vmem:[#allocation2 + $0x2d0] sm:$0xff]
    %v167 = vld [vmem:[#allocation2 + $0x2d8] sm:$0xff]
    %v168 = vld [vmem:[#allocation2 + $0x2e0] sm:$0xff]
    %v169 = vld [vmem:[#allocation2 + $0x2e8] sm:$0xff]
    %v170 = vld [vmem:[#allocation2 + $0x2f0] sm:$0xff]
    %v171 = vld [vmem:[#allocation2 + $0x2f8] sm:$0xff]
    %v172 = vld [vmem:[#allocation2 + $0x300] sm:$0xff]
    %v173 = vld [vmem:[#allocation2 + $0x308] sm:$0xff]
    %v174 = vld [vmem:[#allocation2 + $0x310] sm:$0xff]
    %v175 = vld [vmem:[#allocation2 + $0x318] sm:$0xff]
    %v176 = vld [vmem:[#allocation2 + $0x320] sm:$0xff]
    %v177 = vld [vmem:[#allocation2 + $0x328] sm:$0xff]
    %v178 = vld [vmem:[#allocation2 + $0x330] sm:$0xff]
    %v179 = vld [vmem:[#allocation2 + $0x338] sm:$0xff]
    %v180 = vld [vmem:[#allocation2 + $0x340] sm:$0xff]
    %v181 = vld [vmem:[#allocation2 + $0x348] sm:$0xff]
    %v182 = vld [vmem:[#allocation2 + $0x350] sm:$0xff]
    %v183 = vld [vmem:[#allocation2 + $0x358] sm:$0xff]
    %v184 = vld [vmem:[#allocation2 + $0x360] sm:$0xff]
    %v185 = vld [vmem:[#allocation2 + $0x368] sm:$0xff]
    %v186 = vld [vmem:[#allocation2 + $0x370] sm:$0xff]
    %v187 = vld [vmem:[#allocation2 + $0x378] sm:$0xff]
    %v188 = vld [vmem:[#allocation2 + $0x380] sm:$0xff]
    %v189 = vld [vmem:[#allocation2 + $0x388] sm:$0xff]
    %v190 = vld [vmem:[#allocation2 + $0x390] sm:$0xff]
    %v191 = vld [vmem:[#allocation2 + $0x398] sm:$0xff]
    %v192 = vld [vmem:[#allocation2 + $0x3a0] sm:$0xff]
    %v193 = vld [vmem:[#allocation2 + $0x3a8] sm:$0xff]
    %v194 = vld [vmem:[#allocation2 + $0x3b0] sm:$0xff]
    %v195 = vld [vmem:[#allocation2 + $0x3b8] sm:$0xff]
    %v196 = vld [vmem:[#allocation2 + $0x3c0] sm:$0xff]
    %v197 = vld [vmem:[#allocation2 + $0x3c8] sm:$0xff]
    %v198 = vld [vmem:[#allocation2 + $0x3d0] sm:$0xff]
    %v199 = vld [vmem:[#allocation2 + $0x3d8] sm:$0xff]
    %v200 = vld [vmem:[#allocation2 + $0x3e0] sm:$0xff]
    %v201 = vld [vmem:[#allocation2 + $0x3e8] sm:$0xff]
    %v202 = vld [vmem:[#allocation2 + $0x3f0] sm:$0xff]
    %v203 = vld [vmem:[#allocation2 + $0x3f8] sm:$0xff]
    %v204 = vld [vmem:[#allocation2 + $0x400] sm:$0xff]
    %v205 = vld [vmem:[#allocation2 + $0x408] sm:$0xff]
    %v206 = vld [vmem:[#allocation2 + $0x410] sm:$0xff]
    %v207 = vld [vmem:[#allocation2 + $0x418] sm:$0xff]
    %v208 = vld [vmem:[#allocation2 + $0x420] sm:$0xff]
    %v209 = vld [vmem:[#allocation2 + $0x428] sm:$0xff]
    %v210 = vld [vmem:[#allocation2 + $0x430] sm:$0xff]
    %v211 = vld [vmem:[#allocation2 + $0x438] sm:$0xff]
    %v212 = vld [vmem:[#allocation2 + $0x440] sm:$0xff]
    %v213 = vld [vmem:[#allocation2 + $0x448] sm:$0xff]
    %v214 = vld [vmem:[#allocation2 + $0x450] sm:$0xff]
    %v215 = vld [vmem:[#allocation2 + $0x458] sm:$0xff]
    %v216 = vld [vmem:[#allocation2 + $0x460] sm:$0xff]
    %v217 = vld [vmem:[#allocation2 + $0x468] sm:$0xff]
    %v218 = vld [vmem:[#allocation2 + $0x470] sm:$0xff]
    %v219 = vld [vmem:[#allocation2 + $0x478] sm:$0xff]
    %v220 = vld [vmem:[#allocation2 + $0x480] sm:$0xff]
    %v221 = vld [vmem:[#allocation2 + $0x488] sm:$0xff]
    %v222 = vld [vmem:[#allocation2 + $0x490] sm:$0xff]
    %v223 = vld [vmem:[#allocation2 + $0x498] sm:$0xff]
    %v224 = vld [vmem:[#allocation2 + $0x4a0] sm:$0xff]
    %v225 = vld [vmem:[#allocation2 + $0x4a8] sm:$0xff]
    %v226 = vld [vmem:[#allocation2 + $0x4b0] sm:$0xff]
    %v227 = vld [vmem:[#allocation2 + $0x4b8] sm:$0xff]
    %v228 = vld [vmem:[#allocation2 + $0x4c0] sm:$0xff]
    %v229 = vld [vmem:[#allocation2 + $0x4c8] sm:$0xff]
    %v230 = vld [vmem:[#allocation2 + $0x4d0] sm:$0xff]
    %v231 = vld [vmem:[#allocation2 + $0x4d8] sm:$0xff]
    %v232 = vld [vmem:[#allocation2 + $0x4e0] sm:$0xff]
    %v233 = vld [vmem:[#allocation2 + $0x4e8] sm:$0xff]
    %v234 = vld [vmem:[#allocation2 + $0x4f0] sm:$0xff]
    %v235 = vld [vmem:[#allocation2 + $0x4f8] sm:$0xff]
    %v236 = vld [vmem:[#allocation2 + $0x500] sm:$0xff]
    %v237 = vld [vmem:[#allocation2 + $0x508] sm:$0xff]
    %v238 = vld [vmem:[#allocation2 + $0x510] sm:$0xff]
    %v239 = vld [vmem:[#allocation2 + $0x518] sm:$0xff]
    %v240 = vld [vmem:[#allocation2 + $0x520] sm:$0xff]
    %v241 = vld [vmem:[#allocation2 + $0x528] sm:$0xff]
    %v242 = vld [vmem:[#allocation2 + $0x530] sm:$0xff]
    %v243 = vld [vmem:[#allocation2 + $0x538] sm:$0xff]
    %v244 = vld [vmem:[#allocation2 + $0x540] sm:$0xff]
    %v245 = vld [vmem:[#allocation2 + $0x548] sm:$0xff]
    %v246 = vld [vmem:[#allocation2 + $0x550] sm:$0xff]
    %v247 = vld [vmem:[#allocation2 + $0x558] sm:$0xff]
    %v248 = vld [vmem:[#allocation2 + $0x560] sm:$0xff]
    %v249 = vld [vmem:[#allocation2 + $0x568] sm:$0xff]
    %v250 = vld [vmem:[#allocation2 + $0x570] sm:$0xff]
    %v251 = vld [vmem:[#allocation2 + $0x578] sm:$0xff]
    %v252 = vld [vmem:[#allocation2 + $0x580] sm:$0xff]
    %v253 = vld [vmem:[#allocation2 + $0x588] sm:$0xff]
    %v254 = vld [vmem:[#allocation2 + $0x590] sm:$0xff]
    %v255 = vld [vmem:[#allocation2 + $0x598] sm:$0xff]
    %v256 = vld [vmem:[#allocation2 + $0x5a0] sm:$0xff]
    %v257 = vld [vmem:[#allocation2 + $0x5a8] sm:$0xff]
    %v258 = vld [vmem:[#allocation2 + $0x5b0] sm:$0xff]
    %v259 = vld [vmem:[#allocation2 + $0x5b8] sm:$0xff]
    %v260 = vld [vmem:[#allocation2 + $0x5c0] sm:$0xff]
    %v261 = vld [vmem:[#allocation2 + $0x5c8] sm:$0xff]
    %v262 = vld [vmem:[#allocation2 + $0x5d0] sm:$0xff]
    %v263 = vld [vmem:[#allocation2 + $0x5d8] sm:$0xff]
    %v264 = vld [vmem:[#allocation2 + $0x5e0] sm:$0xff]
    %v265 = vld [vmem:[#allocation2 + $0x5e8] sm:$0xff]
    %v266 = vld [vmem:[#allocation2 + $0x5f0] sm:$0xff]
    %v267 = vld [vmem:[#allocation2 + $0x5f8] sm:$0xff]
    %v268 = vld [vmem:[#allocation2 + $0x600] sm:$0xff]
    %v269 = vld [vmem:[#allocation2 + $0x608] sm:$0xff]
    %v270 = vld [vmem:[#allocation2 + $0x610] sm:$0xff]
    %v271 = vld [vmem:[#allocation2 + $0x618] sm:$0xff]
    %v272 = vld [vmem:[%s2] sm:$0xf]
    %v274 = vlaneseq
    %v275 = vshrl.u32 %v274, 7
    %v276 = vsub.s32 0, %v275
    %v277 = vrot.slane %v272, %v276
    %v278 = vlaneseq
    %v279 = vshrl.u32 %v278, 7
    %v280 = vsub.s32 1, %v279
    %v281 = vrot.slane %v272, %v280
    %v282 = vlaneseq
    %v283 = vshrl.u32 %v282, 7
    %v284 = vsub.s32 2, %v283
    %v285 = vrot.slane %v272, %v284
    %v286 = vlaneseq
    %v287 = vshrl.u32 %v286, 7
    %v288 = vsub.s32 3, %v287
    %v289 = vrot.slane %v272, %v288
    %v302 = vunpack.c.l.b16 %v68
    %v303 = vunpack.c.h.b16 %v68
    %v304 = vunpack.c.l.b16 %v69
    %v305 = vunpack.c.h.b16 %v69
    %v306 = vunpack.c.l.b16 %v70
    %v307 = vunpack.c.h.b16 %v70
    %v308 = vunpack.c.l.b16 %v71
    %v309 = vunpack.c.l.b16 %v72
    %v310 = vunpack.c.h.b16 %v72
    %v311 = vunpack.c.l.b16 %v73
    %v312 = vunpack.c.h.b16 %v73
    %v313 = vunpack.c.l.b16 %v74
    %v314 = vunpack.c.h.b16 %v74
    %v315 = vunpack.c.l.b16 %v75
    %v316 = vpack.c.b16 %v309, %v302
    %v317 = vpack.c.b16 %v310, %v303
    %v318 = vpack.c.b16 %v311, %v304
    %v319 = vpack.c.b16 %v312, %v305
    %v320 = vpack.c.b16 %v313, %v306
    %v321 = vpack.c.b16 %v314, %v307
    %v322 = vpack.c.b16 %v315, %v308
    %v525 = vunpack.c.l.b16 %v76
    %v526 = vunpack.c.h.b16 %v76
    %v527 = vunpack.c.l.b16 %v77
    %v528 = vunpack.c.h.b16 %v77
    %v529 = vunpack.c.l.b16 %v78
    %v530 = vunpack.c.h.b16 %v78
    %v531 = vunpack.c.l.b16 %v79
    %v532 = vunpack.c.h.b16 %v79
    %v533 = vunpack.c.l.b16 %v80
    %v534 = vunpack.c.h.b16 %v80
    %v535 = vunpack.c.l.b16 %v81
    %v536 = vunpack.c.h.b16 %v81
    %v537 = vunpack.c.l.b16 %v82
    %v538 = vunpack.c.h.b16 %v82
    %v539 = vunpack.c.l.b16 %v83
    %v540 = vunpack.c.h.b16 %v83
    %v541 = vunpack.c.l.b16 %v84
    %v542 = vunpack.c.h.b16 %v84
    %v543 = vunpack.c.l.b16 %v85
    %v544 = vunpack.c.h.b16 %v85
    %v545 = vunpack.c.l.b16 %v86
    %v546 = vunpack.c.h.b16 %v86
    %v547 = vunpack.c.l.b16 %v87
    %v548 = vunpack.c.h.b16 %v87
    %v549 = vunpack.c.l.b16 %v88
    %v550 = vunpack.c.h.b16 %v88
    %v551 = vunpack.c.l.b16 %v89
    %v552 = vunpack.c.h.b16 %v89
    %v553 = vunpack.c.l.b16 %v90
    %v554 = vunpack.c.h.b16 %v90
    %v555 = vunpack.c.l.b16 %v91
    %v556 = vunpack.c.h.b16 %v91
    %v557 = vunpack.c.l.b16 %v92
    %v558 = vunpack.c.h.b16 %v92
    %v559 = vunpack.c.l.b16 %v93
    %v560 = vunpack.c.h.b16 %v93
    %v561 = vunpack.c.l.b16 %v94
    %v562 = vunpack.c.h.b16 %v94
    %v563 = vunpack.c.l.b16 %v95
    %v564 = vunpack.c.h.b16 %v95
    %v565 = vunpack.c.l.b16 %v96
    %v566 = vunpack.c.h.b16 %v96
    %v567 = vunpack.c.l.b16 %v97
    %v568 = vunpack.c.h.b16 %v97
    %v569 = vunpack.c.l.b16 %v98
    %v570 = vunpack.c.h.b16 %v98
    %v571 = vunpack.c.l.b16 %v99
    %v572 = vunpack.c.h.b16 %v99
    %v573 = vunpack.c.l.b16 %v100
    %v574 = vunpack.c.h.b16 %v100
    %v575 = vunpack.c.l.b16 %v101
    %v576 = vunpack.c.h.b16 %v101
    %v577 = vunpack.c.l.b16 %v102
    %v578 = vunpack.c.h.b16 %v102
    %v579 = vunpack.c.l.b16 %v103
    %v580 = vunpack.c.h.b16 %v103
    %v581 = vunpack.c.l.b16 %v104
    %v582 = vunpack.c.h.b16 %v104
    %v583 = vunpack.c.l.b16 %v105
    %v584 = vunpack.c.h.b16 %v105
    %v585 = vunpack.c.l.b16 %v106
    %v586 = vunpack.c.h.b16 %v106
    %v587 = vunpack.c.l.b16 %v107
    %v588 = vunpack.c.h.b16 %v107
    %v589 = vunpack.c.l.b16 %v108
    %v590 = vunpack.c.h.b16 %v108
    %v591 = vunpack.c.l.b16 %v109
    %v592 = vunpack.c.h.b16 %v109
    %v593 = vunpack.c.l.b16 %v110
    %v594 = vunpack.c.h.b16 %v110
    %v595 = vunpack.c.l.b16 %v111
    %v596 = vunpack.c.h.b16 %v111
    %v597 = vunpack.c.l.b16 %v112
    %v598 = vunpack.c.h.b16 %v112
    %v599 = vunpack.c.l.b16 %v113
    %v600 = vunpack.c.h.b16 %v113
    %v601 = vunpack.c.l.b16 %v114
    %v602 = vunpack.c.h.b16 %v114
    %v603 = vunpack.c.l.b16 %v115
    %v604 = vunpack.c.h.b16 %v115
    %v605 = vunpack.c.l.b16 %v116
    %v606 = vunpack.c.h.b16 %v116
    %v607 = vunpack.c.l.b16 %v117
    %v608 = vunpack.c.h.b16 %v117
    %v609 = vunpack.c.l.b16 %v118
    %v610 = vunpack.c.h.b16 %v118
    %v611 = vunpack.c.l.b16 %v119
    %v612 = vunpack.c.h.b16 %v119
    %v613 = vunpack.c.l.b16 %v120
    %v614 = vunpack.c.h.b16 %v120
    %v615 = vunpack.c.l.b16 %v121
    %v616 = vunpack.c.h.b16 %v121
    %v617 = vunpack.c.l.b16 %v122
    %v618 = vunpack.c.h.b16 %v122
    %v619 = vunpack.c.l.b16 %v123
    %v620 = vunpack.c.h.b16 %v123
    %v621 = vunpack.c.l.b16 %v124
    %v622 = vunpack.c.h.b16 %v124
    %v623 = vunpack.c.l.b16 %v125
    %v624 = vunpack.c.h.b16 %v125
    %v625 = vunpack.c.l.b16 %v126
    %v626 = vunpack.c.h.b16 %v126
    %v627 = vunpack.c.l.b16 %v127
    %v628 = vunpack.c.h.b16 %v127
    %v629 = vunpack.c.l.b16 %v128
    %v630 = vunpack.c.h.b16 %v128
    %v631 = vunpack.c.l.b16 %v129
    %v632 = vunpack.c.h.b16 %v129
    %v633 = vunpack.c.l.b16 %v130
    %v634 = vunpack.c.h.b16 %v130
    %v635 = vunpack.c.l.b16 %v131
    %v636 = vunpack.c.h.b16 %v131
    %v637 = vunpack.c.l.b16 %v132
    %v638 = vunpack.c.h.b16 %v132
    %v639 = vunpack.c.l.b16 %v133
    %v640 = vunpack.c.h.b16 %v133
    %v641 = vunpack.c.l.b16 %v134
    %v642 = vunpack.c.h.b16 %v134
    %v643 = vunpack.c.l.b16 %v135
    %v644 = vunpack.c.h.b16 %v135
    %v645 = vunpack.c.l.b16 %v136
    %v646 = vunpack.c.h.b16 %v136
    %v647 = vunpack.c.l.b16 %v137
    %v648 = vunpack.c.h.b16 %v137
    %v649 = vunpack.c.l.b16 %v138
    %v650 = vunpack.c.h.b16 %v138
    %v651 = vunpack.c.l.b16 %v139
    %v652 = vunpack.c.h.b16 %v139
    %v653 = vunpack.c.l.b16 %v140
    %v654 = vunpack.c.h.b16 %v140
    %v655 = vunpack.c.l.b16 %v141
    %v656 = vunpack.c.h.b16 %v141
    %v657 = vunpack.c.l.b16 %v142
    %v658 = vunpack.c.h.b16 %v142
    %v659 = vunpack.c.l.b16 %v143
    %v660 = vunpack.c.h.b16 %v143
    %v661 = vunpack.c.l.b16 %v144
    %v662 = vunpack.c.h.b16 %v144
    %v663 = vunpack.c.l.b16 %v145
    %v664 = vunpack.c.h.b16 %v145
    %v665 = vunpack.c.l.b16 %v146
    %v666 = vunpack.c.h.b16 %v146
    %v667 = vunpack.c.l.b16 %v147
    %v668 = vunpack.c.h.b16 %v147
    %v669 = vunpack.c.l.b16 %v148
    %v670 = vunpack.c.h.b16 %v148
    %v671 = vunpack.c.l.b16 %v149
    %v672 = vunpack.c.h.b16 %v149
    %v673 = vunpack.c.l.b16 %v150
    %v674 = vunpack.c.h.b16 %v150
    %v675 = vunpack.c.l.b16 %v151
    %v676 = vunpack.c.h.b16 %v151
    %v677 = vunpack.c.l.b16 %v152
    %v678 = vunpack.c.h.b16 %v152
    %v679 = vunpack.c.l.b16 %v153
    %v680 = vunpack.c.h.b16 %v153
    %v681 = vunpack.c.l.b16 %v154
    %v682 = vunpack.c.h.b16 %v154
    %v683 = vunpack.c.l.b16 %v155
    %v684 = vunpack.c.h.b16 %v155
    %v685 = vunpack.c.l.b16 %v156
    %v686 = vunpack.c.h.b16 %v156
    %v687 = vunpack.c.l.b16 %v157
    %v688 = vunpack.c.h.b16 %v157
    %v689 = vunpack.c.l.b16 %v158
    %v690 = vunpack.c.h.b16 %v158
    %v691 = vunpack.c.l.b16 %v159
    %v692 = vunpack.c.h.b16 %v159
    %v693 = vunpack.c.l.b16 %v160
    %v694 = vunpack.c.h.b16 %v160
    %v695 = vunpack.c.l.b16 %v161
    %v696 = vunpack.c.h.b16 %v161
    %v697 = vunpack.c.l.b16 %v162
    %v698 = vunpack.c.h.b16 %v162
    %v699 = vunpack.c.l.b16 %v163
    %v700 = vunpack.c.h.b16 %v163
    %v701 = vunpack.c.l.b16 %v164
    %v702 = vunpack.c.h.b16 %v164
    %v703 = vunpack.c.l.b16 %v165
    %v704 = vunpack.c.h.b16 %v165
    %v705 = vunpack.c.l.b16 %v166
    %v706 = vunpack.c.h.b16 %v166
    %v707 = vunpack.c.l.b16 %v167
    %v708 = vunpack.c.h.b16 %v167
    %v709 = vunpack.c.l.b16 %v168
    %v710 = vunpack.c.h.b16 %v168
    %v711 = vunpack.c.l.b16 %v169
    %v712 = vunpack.c.h.b16 %v169
    %v713 = vunpack.c.l.b16 %v170
    %v714 = vunpack.c.h.b16 %v170
    %v715 = vunpack.c.l.b16 %v171
    %v716 = vunpack.c.h.b16 %v171
    %v717 = vunpack.c.l.b16 %v172
    %v718 = vunpack.c.h.b16 %v172
    %v719 = vunpack.c.l.b16 %v173
    %v720 = vunpack.c.h.b16 %v173
    %v721 = vunpack.c.l.b16 %v174
    %v722 = vunpack.c.h.b16 %v174
    %v723 = vunpack.c.l.b16 %v175
    %v724 = vunpack.c.h.b16 %v175
    %v725 = vunpack.c.l.b16 %v176
    %v726 = vunpack.c.h.b16 %v176
    %v727 = vunpack.c.l.b16 %v177
    %v728 = vunpack.c.h.b16 %v177
    %v729 = vunpack.c.l.b16 %v178
    %v730 = vunpack.c.h.b16 %v178
    %v731 = vunpack.c.l.b16 %v179
    %v732 = vunpack.c.h.b16 %v179
    %v733 = vunpack.c.l.b16 %v180
    %v734 = vunpack.c.h.b16 %v180
    %v735 = vunpack.c.l.b16 %v181
    %v736 = vunpack.c.h.b16 %v181
    %v737 = vunpack.c.l.b16 %v182
    %v738 = vunpack.c.h.b16 %v182
    %v739 = vunpack.c.l.b16 %v183
    %v740 = vunpack.c.h.b16 %v183
    %v741 = vunpack.c.l.b16 %v184
    %v742 = vunpack.c.h.b16 %v184
    %v743 = vunpack.c.l.b16 %v185
    %v744 = vunpack.c.h.b16 %v185
    %v745 = vunpack.c.l.b16 %v186
    %v746 = vunpack.c.h.b16 %v186
    %v747 = vunpack.c.l.b16 %v187
    %v748 = vunpack.c.h.b16 %v187
    %v749 = vunpack.c.l.b16 %v188
    %v750 = vunpack.c.h.b16 %v188
    %v751 = vunpack.c.l.b16 %v189
    %v752 = vunpack.c.h.b16 %v189
    %v753 = vunpack.c.l.b16 %v190
    %v754 = vunpack.c.h.b16 %v190
    %v755 = vunpack.c.l.b16 %v191
    %v756 = vunpack.c.h.b16 %v191
    %v757 = vunpack.c.l.b16 %v192
    %v758 = vunpack.c.h.b16 %v192
    %v759 = vunpack.c.l.b16 %v193
    %v760 = vunpack.c.h.b16 %v193
    %v761 = vunpack.c.l.b16 %v194
    %v762 = vunpack.c.h.b16 %v194
    %v763 = vunpack.c.l.b16 %v195
    %v764 = vunpack.c.h.b16 %v195
    %v765 = vunpack.c.l.b16 %v196
    %v766 = vunpack.c.h.b16 %v196
    %v767 = vunpack.c.l.b16 %v197
    %v768 = vunpack.c.h.b16 %v197
    %v769 = vunpack.c.l.b16 %v198
    %v770 = vunpack.c.h.b16 %v198
    %v771 = vunpack.c.l.b16 %v199
    %v772 = vunpack.c.h.b16 %v199
    %v773 = vunpack.c.l.b16 %v200
    %v774 = vunpack.c.h.b16 %v200
    %v775 = vunpack.c.l.b16 %v201
    %v776 = vunpack.c.h.b16 %v201
    %v777 = vunpack.c.l.b16 %v202
    %v778 = vunpack.c.h.b16 %v202
    %v779 = vunpack.c.l.b16 %v203
    %v780 = vunpack.c.h.b16 %v203
    %v781 = vunpack.c.l.b16 %v204
    %v782 = vunpack.c.h.b16 %v204
    %v783 = vunpack.c.l.b16 %v205
    %v784 = vunpack.c.h.b16 %v205
    %v785 = vunpack.c.l.b16 %v206
    %v786 = vunpack.c.h.b16 %v206
    %v787 = vunpack.c.l.b16 %v207
    %v788 = vunpack.c.h.b16 %v207
    %v789 = vunpack.c.l.b16 %v208
    %v790 = vunpack.c.h.b16 %v208
    %v791 = vunpack.c.l.b16 %v209
    %v792 = vunpack.c.h.b16 %v209
    %v793 = vunpack.c.l.b16 %v210
    %v794 = vunpack.c.h.b16 %v210
    %v795 = vunpack.c.l.b16 %v211
    %v796 = vunpack.c.h.b16 %v211
    %v797 = vunpack.c.l.b16 %v212
    %v798 = vunpack.c.h.b16 %v212
    %v799 = vunpack.c.l.b16 %v213
    %v800 = vunpack.c.h.b16 %v213
    %v801 = vunpack.c.l.b16 %v214
    %v802 = vunpack.c.h.b16 %v214
    %v803 = vunpack.c.l.b16 %v215
    %v804 = vunpack.c.h.b16 %v215
    %v805 = vunpack.c.l.b16 %v216
    %v806 = vunpack.c.h.b16 %v216
    %v807 = vunpack.c.l.b16 %v217
    %v808 = vunpack.c.h.b16 %v217
    %v809 = vunpack.c.l.b16 %v218
    %v810 = vunpack.c.h.b16 %v218
    %v811 = vunpack.c.l.b16 %v219
    %v812 = vunpack.c.h.b16 %v219
    %v813 = vunpack.c.l.b16 %v220
    %v814 = vunpack.c.h.b16 %v220
    %v815 = vunpack.c.l.b16 %v221
    %v816 = vunpack.c.h.b16 %v221
    %v817 = vunpack.c.l.b16 %v222
    %v818 = vunpack.c.h.b16 %v222
    %v819 = vunpack.c.l.b16 %v223
    %v820 = vunpack.c.h.b16 %v223
    %v821 = vunpack.c.l.b16 %v224
    %v822 = vunpack.c.h.b16 %v224
    %v823 = vunpack.c.l.b16 %v225
    %v824 = vunpack.c.h.b16 %v225
    %v825 = vunpack.c.l.b16 %v226
    %v826 = vunpack.c.h.b16 %v226
    %v827 = vunpack.c.l.b16 %v227
    %v828 = vunpack.c.h.b16 %v227
    %v829 = vunpack.c.l.b16 %v228
    %v830 = vunpack.c.h.b16 %v228
    %v831 = vunpack.c.l.b16 %v229
    %v832 = vunpack.c.h.b16 %v229
    %v833 = vunpack.c.l.b16 %v230
    %v834 = vunpack.c.h.b16 %v230
    %v835 = vunpack.c.l.b16 %v231
    %v836 = vunpack.c.h.b16 %v231
    %v837 = vunpack.c.l.b16 %v232
    %v838 = vunpack.c.h.b16 %v232
    %v839 = vunpack.c.l.b16 %v233
    %v840 = vunpack.c.h.b16 %v233
    %v841 = vunpack.c.l.b16 %v234
    %v842 = vunpack.c.h.b16 %v234
    %v843 = vunpack.c.l.b16 %v235
    %v844 = vunpack.c.h.b16 %v235
    %v845 = vunpack.c.l.b16 %v236
    %v846 = vunpack.c.h.b16 %v236
    %v847 = vunpack.c.l.b16 %v237
    %v848 = vunpack.c.h.b16 %v237
    %v849 = vunpack.c.l.b16 %v238
    %v850 = vunpack.c.h.b16 %v238
    %v851 = vunpack.c.l.b16 %v239
    %v852 = vunpack.c.h.b16 %v239
    %v853 = vunpack.c.l.b16 %v240
    %v854 = vunpack.c.h.b16 %v240
    %v855 = vunpack.c.l.b16 %v241
    %v856 = vunpack.c.h.b16 %v241
    %v857 = vunpack.c.l.b16 %v242
    %v858 = vunpack.c.h.b16 %v242
    %v859 = vunpack.c.l.b16 %v243
    %v860 = vunpack.c.h.b16 %v243
    %v861 = vunpack.c.l.b16 %v244
    %v862 = vunpack.c.h.b16 %v244
    %v863 = vunpack.c.l.b16 %v245
    %v864 = vunpack.c.h.b16 %v245
    %v865 = vunpack.c.l.b16 %v246
    %v866 = vunpack.c.h.b16 %v246
    %v867 = vunpack.c.l.b16 %v247
    %v868 = vunpack.c.h.b16 %v247
    %v869 = vunpack.c.l.b16 %v248
    %v870 = vunpack.c.h.b16 %v248
    %v871 = vunpack.c.l.b16 %v249
    %v872 = vunpack.c.h.b16 %v249
    %v873 = vunpack.c.l.b16 %v250
    %v874 = vunpack.c.h.b16 %v250
    %v875 = vunpack.c.l.b16 %v251
    %v876 = vunpack.c.h.b16 %v251
    %v877 = vunpack.c.l.b16 %v252
    %v878 = vunpack.c.h.b16 %v252
    %v879 = vunpack.c.l.b16 %v253
    %v880 = vunpack.c.h.b16 %v253
    %v881 = vunpack.c.l.b16 %v254
    %v882 = vunpack.c.h.b16 %v254
    %v883 = vunpack.c.l.b16 %v255
    %v884 = vunpack.c.h.b16 %v255
    %v885 = vunpack.c.l.b16 %v256
    %v886 = vunpack.c.h.b16 %v256
    %v887 = vunpack.c.l.b16 %v257
    %v888 = vunpack.c.h.b16 %v257
    %v889 = vunpack.c.l.b16 %v258
    %v890 = vunpack.c.h.b16 %v258
    %v891 = vunpack.c.l.b16 %v259
    %v892 = vunpack.c.h.b16 %v259
    %v893 = vunpack.c.l.b16 %v260
    %v894 = vunpack.c.h.b16 %v260
    %v895 = vunpack.c.l.b16 %v261
    %v896 = vunpack.c.h.b16 %v261
    %v897 = vunpack.c.l.b16 %v262
    %v898 = vunpack.c.h.b16 %v262
    %v899 = vunpack.c.l.b16 %v263
    %v900 = vunpack.c.h.b16 %v263
    %v901 = vunpack.c.l.b16 %v264
    %v902 = vunpack.c.h.b16 %v264
    %v903 = vunpack.c.l.b16 %v265
    %v904 = vunpack.c.h.b16 %v265
    %v905 = vunpack.c.l.b16 %v266
    %v906 = vunpack.c.h.b16 %v266
    %v907 = vunpack.c.l.b16 %v267
    %v908 = vunpack.c.h.b16 %v267
    %v909 = vunpack.c.l.b16 %v268
    %v910 = vunpack.c.h.b16 %v268
    %v911 = vunpack.c.l.b16 %v269
    %v912 = vunpack.c.h.b16 %v269
    %v913 = vunpack.c.l.b16 %v270
    %v914 = vunpack.c.h.b16 %v270
    %v915 = vunpack.c.l.b16 %v271
    %v916 = vunpack.c.h.b16 %v271
    %v917 = vpack.c.b16 %v529, %v525
    %v918 = vpack.c.b16 %v530, %v526
    %v919 = vpack.c.b16 %v531, %v527
    %v920 = vpack.c.b16 %v532, %v528
    %v921 = vpack.c.b16 %v537, %v533
    %v922 = vpack.c.b16 %v538, %v534
    %v923 = vpack.c.b16 %v539, %v535
    %v924 = vpack.c.b16 %v540, %v536
    %v925 = vpack.c.b16 %v545, %v541
    %v926 = vpack.c.b16 %v546, %v542
    %v927 = vpack.c.b16 %v547, %v543
    %v928 = vpack.c.b16 %v548, %v544
    %v929 = vpack.c.b16 %v553, %v549
    %v930 = vpack.c.b16 %v554, %v550
    %v931 = vpack.c.b16 %v555, %v551
    %v932 = vpack.c.b16 %v556, %v552
    %v933 = vpack.c.b16 %v561, %v557
    %v934 = vpack.c.b16 %v562, %v558
    %v935 = vpack.c.b16 %v563, %v559
    %v936 = vpack.c.b16 %v564, %v560
    %v937 = vpack.c.b16 %v569, %v565
    %v938 = vpack.c.b16 %v570, %v566
    %v939 = vpack.c.b16 %v571, %v567
    %v940 = vpack.c.b16 %v572, %v568
    %v941 = vpack.c.b16 %v577, %v573
    %v942 = vpack.c.b16 %v578, %v574
    %v943 = vpack.c.b16 %v579, %v575
    %v944 = vpack.c.b16 %v580, %v576
    %v945 = vpack.c.b16 %v585, %v581
    %v946 = vpack.c.b16 %v586, %v582
    %v947 = vpack.c.b16 %v587, %v583
    %v948 = vpack.c.b16 %v588, %v584
    %v949 = vpack.c.b16 %v593, %v589
    %v950 = vpack.c.b16 %v594, %v590
    %v951 = vpack.c.b16 %v595, %v591
    %v952 = vpack.c.b16 %v596, %v592
    %v953 = vpack.c.b16 %v601, %v597
    %v954 = vpack.c.b16 %v602, %v598
    %v955 = vpack.c.b16 %v603, %v599
    %v956 = vpack.c.b16 %v604, %v600
    %v957 = vpack.c.b16 %v609, %v605
    %v958 = vpack.c.b16 %v610, %v606
    %v959 = vpack.c.b16 %v611, %v607
    %v960 = vpack.c.b16 %v612, %v608
    %v961 = vpack.c.b16 %v617, %v613
    %v962 = vpack.c.b16 %v618, %v614
    %v963 = vpack.c.b16 %v619, %v615
    %v964 = vpack.c.b16 %v620, %v616
    %v965 = vpack.c.b16 %v625, %v621
    %v966 = vpack.c.b16 %v626, %v622
    %v967 = vpack.c.b16 %v627, %v623
    %v968 = vpack.c.b16 %v628, %v624
    %v969 = vpack.c.b16 %v633, %v629
    %v970 = vpack.c.b16 %v634, %v630
    %v971 = vpack.c.b16 %v635, %v631
    %v972 = vpack.c.b16 %v636, %v632
    %v973 = vpack.c.b16 %v641, %v637
    %v974 = vpack.c.b16 %v642, %v638
    %v975 = vpack.c.b16 %v643, %v639
    %v976 = vpack.c.b16 %v644, %v640
    %v977 = vpack.c.b16 %v649, %v645
    %v978 = vpack.c.b16 %v650, %v646
    %v979 = vpack.c.b16 %v651, %v647
    %v980 = vpack.c.b16 %v652, %v648
    %v981 = vpack.c.b16 %v657, %v653
    %v982 = vpack.c.b16 %v658, %v654
    %v983 = vpack.c.b16 %v659, %v655
    %v984 = vpack.c.b16 %v660, %v656
    %v985 = vpack.c.b16 %v665, %v661
    %v986 = vpack.c.b16 %v666, %v662
    %v987 = vpack.c.b16 %v667, %v663
    %v988 = vpack.c.b16 %v668, %v664
    %v989 = vpack.c.b16 %v673, %v669
    %v990 = vpack.c.b16 %v674, %v670
    %v991 = vpack.c.b16 %v675, %v671
    %v992 = vpack.c.b16 %v676, %v672
    %v993 = vpack.c.b16 %v681, %v677
    %v994 = vpack.c.b16 %v682, %v678
    %v995 = vpack.c.b16 %v683, %v679
    %v996 = vpack.c.b16 %v684, %v680
    %v997 = vpack.c.b16 %v689, %v685
    %v998 = vpack.c.b16 %v690, %v686
    %v999 = vpack.c.b16 %v691, %v687
    %v1000 = vpack.c.b16 %v692, %v688
    %v1001 = vpack.c.b16 %v697, %v693
    %v1002 = vpack.c.b16 %v698, %v694
    %v1003 = vpack.c.b16 %v699, %v695
    %v1004 = vpack.c.b16 %v700, %v696
    %v1005 = vpack.c.b16 %v705, %v701
    %v1006 = vpack.c.b16 %v706, %v702
    %v1007 = vpack.c.b16 %v707, %v703
    %v1008 = vpack.c.b16 %v708, %v704
    %v1009 = vpack.c.b16 %v713, %v709
    %v1010 = vpack.c.b16 %v714, %v710
    %v1011 = vpack.c.b16 %v715, %v711
    %v1012 = vpack.c.b16 %v716, %v712
    %v1013 = vpack.c.b16 %v721, %v717
    %v1014 = vpack.c.b16 %v722, %v718
    %v1015 = vpack.c.b16 %v723, %v719
    %v1016 = vpack.c.b16 %v724, %v720
    %v1017 = vpack.c.b16 %v729, %v725
    %v1018 = vpack.c.b16 %v730, %v726
    %v1019 = vpack.c.b16 %v731, %v727
    %v1020 = vpack.c.b16 %v732, %v728
    %v1021 = vpack.c.b16 %v737, %v733
    %v1022 = vpack.c.b16 %v738, %v734
    %v1023 = vpack.c.b16 %v739, %v735
    %v1024 = vpack.c.b16 %v740, %v736
    %v1025 = vpack.c.b16 %v745, %v741
    %v1026 = vpack.c.b16 %v746, %v742
    %v1027 = vpack.c.b16 %v747, %v743
    %v1028 = vpack.c.b16 %v748, %v744
    %v1029 = vpack.c.b16 %v753, %v749
    %v1030 = vpack.c.b16 %v754, %v750
    %v1031 = vpack.c.b16 %v755, %v751
    %v1032 = vpack.c.b16 %v756, %v752
    %v1033 = vpack.c.b16 %v761, %v757
    %v1034 = vpack.c.b16 %v762, %v758
    %v1035 = vpack.c.b16 %v763, %v759
    %v1036 = vpack.c.b16 %v764, %v760
    %v1037 = vpack.c.b16 %v769, %v765
    %v1038 = vpack.c.b16 %v770, %v766
    %v1039 = vpack.c.b16 %v771, %v767
    %v1040 = vpack.c.b16 %v772, %v768
    %v1041 = vpack.c.b16 %v777, %v773
    %v1042 = vpack.c.b16 %v778, %v774
    %v1043 = vpack.c.b16 %v779, %v775
    %v1044 = vpack.c.b16 %v780, %v776
    %v1045 = vpack.c.b16 %v785, %v781
    %v1046 = vpack.c.b16 %v786, %v782
    %v1047 = vpack.c.b16 %v787, %v783
    %v1048 = vpack.c.b16 %v788, %v784
    %v1049 = vpack.c.b16 %v793, %v789
    %v1050 = vpack.c.b16 %v794, %v790
    %v1051 = vpack.c.b16 %v795, %v791
    %v1052 = vpack.c.b16 %v796, %v792
    %v1053 = vpack.c.b16 %v801, %v797
    %v1054 = vpack.c.b16 %v802, %v798
    %v1055 = vpack.c.b16 %v803, %v799
    %v1056 = vpack.c.b16 %v804, %v800
    %v1057 = vpack.c.b16 %v809, %v805
    %v1058 = vpack.c.b16 %v810, %v806
    %v1059 = vpack.c.b16 %v811, %v807
    %v1060 = vpack.c.b16 %v812, %v808
    %v1061 = vpack.c.b16 %v817, %v813
    %v1062 = vpack.c.b16 %v818, %v814
    %v1063 = vpack.c.b16 %v819, %v815
    %v1064 = vpack.c.b16 %v820, %v816
    %v1065 = vpack.c.b16 %v825, %v821
    %v1066 = vpack.c.b16 %v826, %v822
    %v1067 = vpack.c.b16 %v827, %v823
    %v1068 = vpack.c.b16 %v828, %v824
    %v1069 = vpack.c.b16 %v833, %v829
    %v1070 = vpack.c.b16 %v834, %v830
    %v1071 = vpack.c.b16 %v835, %v831
    %v1072 = vpack.c.b16 %v836, %v832
    %v1073 = vpack.c.b16 %v841, %v837
    %v1074 = vpack.c.b16 %v842, %v838
    %v1075 = vpack.c.b16 %v843, %v839
    %v1076 = vpack.c.b16 %v844, %v840
    %v1077 = vpack.c.b16 %v849, %v845
    %v1078 = vpack.c.b16 %v850, %v846
    %v1079 = vpack.c.b16 %v851, %v847
    %v1080 = vpack.c.b16 %v852, %v848
    %v1081 = vpack.c.b16 %v857, %v853
    %v1082 = vpack.c.b16 %v858, %v854
    %v1083 = vpack.c.b16 %v859, %v855
    %v1084 = vpack.c.b16 %v860, %v856
    %v1085 = vpack.c.b16 %v865, %v861
    %v1086 = vpack.c.b16 %v866, %v862
    %v1087 = vpack.c.b16 %v867, %v863
    %v1088 = vpack.c.b16 %v868, %v864
    %v1089 = vpack.c.b16 %v873, %v869
    %v1090 = vpack.c.b16 %v874, %v870
    %v1091 = vpack.c.b16 %v875, %v871
    %v1092 = vpack.c.b16 %v876, %v872
    %v1093 = vpack.c.b16 %v881, %v877
    %v1094 = vpack.c.b16 %v882, %v878
    %v1095 = vpack.c.b16 %v883, %v879
    %v1096 = vpack.c.b16 %v884, %v880
    %v1097 = vpack.c.b16 %v889, %v885
    %v1098 = vpack.c.b16 %v890, %v886
    %v1099 = vpack.c.b16 %v891, %v887
    %v1100 = vpack.c.b16 %v892, %v888
    %v1101 = vpack.c.b16 %v897, %v893
    %v1102 = vpack.c.b16 %v898, %v894
    %v1103 = vpack.c.b16 %v899, %v895
    %v1104 = vpack.c.b16 %v900, %v896
    %v1105 = vpack.c.b16 %v905, %v901
    %v1106 = vpack.c.b16 %v906, %v902
    %v1107 = vpack.c.b16 %v907, %v903
    %v1108 = vpack.c.b16 %v908, %v904
    %v1109 = vpack.c.b16 %v913, %v909
    %v1110 = vpack.c.b16 %v914, %v910
    %v1111 = vpack.c.b16 %v915, %v911
    %v1112 = vpack.c.b16 %v916, %v912
    %vm1309 = vcmask 130048
    %v1311 = vsel %vm1309, %v322, 0
    %1313 = vmatprep.subr.bf16.mxu0 %v946
    %1314 = vmatpush1.bf16.msra.mxu0 %v945
    %1315 = vmatprep.subr.bf16.mxu0 %v942
    %1316 = vmatpush1.bf16.msra.mxu0 %v941
    %1317 = vmatprep.subr.bf16.mxu0 %v938
    %1318 = vmatpush1.bf16.msra.mxu0 %v937
    %1319 = vmatprep.subr.bf16.mxu0 %v934
    %1320 = vmatpush1.bf16.msra.mxu0 %v933
    %1321 = vmatprep.subr.bf16.mxu0 %v930
    %1322 = vmatpush1.bf16.msra.mxu0 %v929
    %1323 = vmatprep.subr.bf16.mxu0 %v926
    %1324 = vmatpush1.bf16.msra.mxu0 %v925
    %1325 = vmatprep.subr.bf16.mxu0 %v922
    %1326 = vmatpush1.bf16.msra.mxu0 %v921
    %1327 = vmatprep.subr.bf16.mxu0 %v918
    %1328 = vmatpush1.bf16.msra.mxu0 %v917
    %1329 = vmatprep.subr.bf16.mxu0 %v978
    %1330 = vmatpush2.bf16.msra.mxu0 %v977
    %1331 = vmatprep.subr.bf16.mxu0 %v974
    %1332 = vmatpush2.bf16.msra.mxu0 %v973
    %1333 = vmatprep.subr.bf16.mxu0 %v970
    %1334 = vmatpush2.bf16.msra.mxu0 %v969
    %1335 = vmatprep.subr.bf16.mxu0 %v966
    %1336 = vmatpush2.bf16.msra.mxu0 %v965
    %1337 = vmatprep.subr.bf16.mxu0 %v962
    %1338 = vmatpush2.bf16.msra.mxu0 %v961
    %1339 = vmatprep.subr.bf16.mxu0 %v958
    %1340 = vmatpush2.bf16.msra.mxu0 %v957
    %1341 = vmatprep.subr.bf16.mxu0 %v954
    %1342 = vmatpush2.bf16.msra.mxu0 %v953
    %1343 = vmatprep.subr.bf16.mxu0 %v950
    %1344 = vmatpush2.bf16.msra.mxu0 %v949
    %1345 = vmatprep.mubr.bf16.mxu0 %v317
    %1346 = vmatmul.mubr.bf16.gmra.mxu0 %v316
    %v1347 = vpop.f32.mrf.mxu0
    %v1348 = vadd.f32 %v277, %v1347
    %v1349 = vpop.f32.mrf.mxu0
    %v1350 = vadd.f32 %v281, %v1349
    %v1351 = vpop.f32.mrf.mxu0
    %v1352 = vadd.f32 %v277, %v1351
    %v1353 = vpop.f32.mrf.mxu0
    %v1354 = vadd.f32 %v281, %v1353
    %1355 = vdwg.mxu0
    %1356 = vmatprep.subr.bf16.mxu0 %v1010
    %1357 = vmatpush1.bf16.msra.mxu0 %v1009
    %1358 = vmatprep.subr.bf16.mxu0 %v1006
    %1359 = vmatpush1.bf16.msra.mxu0 %v1005
    %1360 = vmatprep.subr.bf16.mxu0 %v1002
    %1361 = vmatpush1.bf16.msra.mxu0 %v1001
    %1362 = vmatprep.subr.bf16.mxu0 %v998
    %1363 = vmatpush1.bf16.msra.mxu0 %v997
    %1364 = vmatprep.subr.bf16.mxu0 %v994
    %1365 = vmatpush1.bf16.msra.mxu0 %v993
    %1366 = vmatprep.subr.bf16.mxu0 %v990
    %1367 = vmatpush1.bf16.msra.mxu0 %v989
    %1368 = vmatprep.subr.bf16.mxu0 %v986
    %1369 = vmatpush1.bf16.msra.mxu0 %v985
    %1370 = vmatprep.subr.bf16.mxu0 %v982
    %1371 = vmatpush1.bf16.msra.mxu0 %v981
    %1372 = vmatprep.subr.bf16.mxu0 %v1042
    %1373 = vmatpush2.bf16.msra.mxu0 %v1041
    %1374 = vmatprep.subr.bf16.mxu0 %v1038
    %1375 = vmatpush2.bf16.msra.mxu0 %v1037
    %1376 = vmatprep.subr.bf16.mxu0 %v1034
    %1377 = vmatpush2.bf16.msra.mxu0 %v1033
    %1378 = vmatprep.subr.bf16.mxu0 %v1030
    %1379 = vmatpush2.bf16.msra.mxu0 %v1029
    %1380 = vmatprep.subr.bf16.mxu0 %v1026
    %1381 = vmatpush2.bf16.msra.mxu0 %v1025
    %1382 = vmatprep.subr.bf16.mxu0 %v1022
    %1383 = vmatpush2.bf16.msra.mxu0 %v1021
    %1384 = vmatprep.subr.bf16.mxu0 %v1018
    %1385 = vmatpush2.bf16.msra.mxu0 %v1017
    %1386 = vmatprep.subr.bf16.mxu0 %v1014
    %1387 = vmatpush2.bf16.msra.mxu0 %v1013
    %1388 = vmatprep.mubr.bf16.mxu0 %v319
    %1389 = vmatmul.mubr.bf16.gmra.mxu0 %v318
    %v1390 = vpop.f32.mrf.mxu0
    %v1391 = vadd.f32 %v1348, %v1390
    %v1392 = vpop.f32.mrf.mxu0
    %v1393 = vadd.f32 %v1350, %v1392
    %v1394 = vpop.f32.mrf.mxu0
    %v1395 = vadd.f32 %v1352, %v1394
    %v1396 = vpop.f32.mrf.mxu0
    %v1397 = vadd.f32 %v1354, %v1396
    %1398 = vdwg.mxu0
    %1399 = vmatprep.subr.bf16.mxu0 %v1074
    %1400 = vmatpush1.bf16.msra.mxu0 %v1073
    %1401 = vmatprep.subr.bf16.mxu0 %v1070
    %1402 = vmatpush1.bf16.msra.mxu0 %v1069
    %1403 = vmatprep.subr.bf16.mxu0 %v1066
    %1404 = vmatpush1.bf16.msra.mxu0 %v1065
    %1405 = vmatprep.subr.bf16.mxu0 %v1062
    %1406 = vmatpush1.bf16.msra.mxu0 %v1061
    %1407 = vmatprep.subr.bf16.mxu0 %v1058
    %1408 = vmatpush1.bf16.msra.mxu0 %v1057
    %1409 = vmatprep.subr.bf16.mxu0 %v1054
    %1410 = vmatpush1.bf16.msra.mxu0 %v1053
    %1411 = vmatprep.subr.bf16.mxu0 %v1050
    %1412 = vmatpush1.bf16.msra.mxu0 %v1049
    %1413 = vmatprep.subr.bf16.mxu0 %v1046
    %1414 = vmatpush1.bf16.msra.mxu0 %v1045
    %1415 = vmatprep.subr.bf16.mxu0 %v1106
    %1416 = vmatpush2.bf16.msra.mxu0 %v1105
    %1417 = vmatprep.subr.bf16.mxu0 %v1102
    %1418 = vmatpush2.bf16.msra.mxu0 %v1101
    %1419 = vmatprep.subr.bf16.mxu0 %v1098
    %1420 = vmatpush2.bf16.msra.mxu0 %v1097
    %1421 = vmatprep.subr.bf16.mxu0 %v1094
    %1422 = vmatpush2.bf16.msra.mxu0 %v1093
    %1423 = vmatprep.subr.bf16.mxu0 %v1090
    %1424 = vmatpush2.bf16.msra.mxu0 %v1089
    %1425 = vmatprep.subr.bf16.mxu0 %v1086
    %1426 = vmatpush2.bf16.msra.mxu0 %v1085
    %1427 = vmatprep.subr.bf16.mxu0 %v1082
    %1428 = vmatpush2.bf16.msra.mxu0 %v1081
    %1429 = vmatprep.subr.bf16.mxu0 %v1078
    %1430 = vmatpush2.bf16.msra.mxu0 %v1077
    %1431 = vmatprep.mubr.bf16.mxu0 %v321
    %1432 = vmatmul.mubr.bf16.gmra.mxu0 %v320
    %v1433 = vpop.f32.mrf.mxu0
    %v1434 = vadd.f32 %v1391, %v1433
    %v1435 = vpop.f32.mrf.mxu0
    %v1436 = vadd.f32 %v1393, %v1435
    %v1437 = vpop.f32.mrf.mxu0
    %v1438 = vadd.f32 %v1395, %v1437
    %v1439 = vpop.f32.mrf.mxu0
    %v1440 = vadd.f32 %v1397, %v1439
    %1441 = vdwg.mxu0
    %1442 = vmatprep.subr.bf16.mxu0 0
    %1443 = vmatpush1.bf16.msra.mxu0 0
    %1444 = vmatprep.subr.bf16.mxu0 0
    %1445 = vmatpush1.bf16.msra.mxu0 0
    %1446 = vmatprep.subr.bf16.mxu0 0
    %1447 = vmatpush1.bf16.msra.mxu0 0
    %1448 = vmatprep.subr.bf16.mxu0 0
    %1449 = vmatpush1.bf16.msra.mxu0 0
    %1450 = vmatprep.subr.bf16.mxu0 0
    %1451 = vmatpush1.bf16.msra.mxu0 0
    %1452 = vmatprep.subr.bf16.mxu0 0
    %1453 = vmatpush1.bf16.msra.mxu0 0
    %1454 = vmatprep.subr.bf16.mxu0 0
    %1455 = vmatpush1.bf16.msra.mxu0 0
    %1456 = vmatprep.subr.bf16.mxu0 %v1110
    %1457 = vmatpush1.bf16.msra.mxu0 %v1109
    %1458 = vmatprep.subr.bf16.mxu0 0
    %1459 = vmatpush2.bf16.msra.mxu0 0
    %1460 = vmatprep.subr.bf16.mxu0 0
    %1461 = vmatpush2.bf16.msra.mxu0 0
    %1462 = vmatprep.subr.bf16.mxu0 0
    %1463 = vmatpush2.bf16.msra.mxu0 0
    %1464 = vmatprep.subr.bf16.mxu0 0
    %1465 = vmatpush2.bf16.msra.mxu0 0
    %1466 = vmatprep.subr.bf16.mxu0 0
    %1467 = vmatpush2.bf16.msra.mxu0 0
    %1468 = vmatprep.subr.bf16.mxu0 0
    %1469 = vmatpush2.bf16.msra.mxu0 0
    %1470 = vmatprep.subr.bf16.mxu0 0
    %1471 = vmatpush2.bf16.msra.mxu0 0
    %1472 = vmatprep.subr.bf16.mxu0 0
    %1473 = vmatpush2.bf16.msra.mxu0 0
    %1474 = vmatprep.mubr.bf16.mxu0 0
    %1475 = vmatmul.mubr.bf16.gmra.mxu0 %v1311
    %v1476 = vpop.f32.mrf.mxu0
    %v1477 = vadd.f32 %v1434, %v1476
    %v1478 = vpop.f32.mrf.mxu0
    %v1479 = vadd.f32 %v1436, %v1478
    %v1480 = vpop.f32.mrf.mxu0
    %v1481 = vadd.f32 %v1438, %v1480
    %v1482 = vpop.f32.mrf.mxu0
    %v1483 = vadd.f32 %v1440, %v1482
    %1484 = vdwg.mxu0
    %1485 = vmatprep.subr.bf16.mxu0 %v948
    %1486 = vmatpush1.bf16.msra.mxu0 %v947
    %1487 = vmatprep.subr.bf16.mxu0 %v944
    %1488 = vmatpush1.bf16.msra.mxu0 %v943
    %1489 = vmatprep.subr.bf16.mxu0 %v940
    %1490 = vmatpush1.bf16.msra.mxu0 %v939
    %1491 = vmatprep.subr.bf16.mxu0 %v936
    %1492 = vmatpush1.bf16.msra.mxu0 %v935
    %1493 = vmatprep.subr.bf16.mxu0 %v932
    %1494 = vmatpush1.bf16.msra.mxu0 %v931
    %1495 = vmatprep.subr.bf16.mxu0 %v928
    %1496 = vmatpush1.bf16.msra.mxu0 %v927
    %1497 = vmatprep.subr.bf16.mxu0 %v924
    %1498 = vmatpush1.bf16.msra.mxu0 %v923
    %1499 = vmatprep.subr.bf16.mxu0 %v920
    %1500 = vmatpush1.bf16.msra.mxu0 %v919
    %1501 = vmatprep.subr.bf16.mxu0 %v980
    %1502 = vmatpush2.bf16.msra.mxu0 %v979
    %1503 = vmatprep.subr.bf16.mxu0 %v976
    %1504 = vmatpush2.bf16.msra.mxu0 %v975
    %1505 = vmatprep.subr.bf16.mxu0 %v972
    %1506 = vmatpush2.bf16.msra.mxu0 %v971
    %1507 = vmatprep.subr.bf16.mxu0 %v968
    %1508 = vmatpush2.bf16.msra.mxu0 %v967
    %1509 = vmatprep.subr.bf16.mxu0 %v964
    %1510 = vmatpush2.bf16.msra.mxu0 %v963
    %1511 = vmatprep.subr.bf16.mxu0 %v960
    %1512 = vmatpush2.bf16.msra.mxu0 %v959
    %1513 = vmatprep.subr.bf16.mxu0 %v956
    %1514 = vmatpush2.bf16.msra.mxu0 %v955
    %1515 = vmatprep.subr.bf16.mxu0 %v952
    %1516 = vmatpush2.bf16.msra.mxu0 %v951
    %1517 = vmatprep.mubr.bf16.mxu0 %v317
    %1518 = vmatmul.mubr.bf16.gmra.mxu0 %v316
    %v1519 = vpop.f32.mrf.mxu0
    %v1520 = vadd.f32 %v285, %v1519
    %v1521 = vpop.f32.mrf.mxu0
    %v1522 = vadd.f32 %v289, %v1521
    %v1523 = vpop.f32.mrf.mxu0
    %v1524 = vadd.f32 %v285, %v1523
    %v1525 = vpop.f32.mrf.mxu0
    %v1526 = vadd.f32 %v289, %v1525
    %1527 = vdwg.mxu0
    %1528 = vmatprep.subr.bf16.mxu0 %v1012
    %1529 = vmatpush1.bf16.msra.mxu0 %v1011
    %1530 = vmatprep.subr.bf16.mxu0 %v1008
    %1531 = vmatpush1.bf16.msra.mxu0 %v1007
    %1532 = vmatprep.subr.bf16.mxu0 %v1004
    %1533 = vmatpush1.bf16.msra.mxu0 %v1003
    %1534 = vmatprep.subr.bf16.mxu0 %v1000
    %1535 = vmatpush1.bf16.msra.mxu0 %v999
    %1536 = vmatprep.subr.bf16.mxu0 %v996
    %1537 = vmatpush1.bf16.msra.mxu0 %v995
    %1538 = vmatprep.subr.bf16.mxu0 %v992
    %1539 = vmatpush1.bf16.msra.mxu0 %v991
    %1540 = vmatprep.subr.bf16.mxu0 %v988
    %1541 = vmatpush1.bf16.msra.mxu0 %v987
    %1542 = vmatprep.subr.bf16.mxu0 %v984
    %1543 = vmatpush1.bf16.msra.mxu0 %v983
    %1544 = vmatprep.subr.bf16.mxu0 %v1044
    %1545 = vmatpush2.bf16.msra.mxu0 %v1043
    %1546 = vmatprep.subr.bf16.mxu0 %v1040
    %1547 = vmatpush2.bf16.msra.mxu0 %v1039
    %1548 = vmatprep.subr.bf16.mxu0 %v1036
    %1549 = vmatpush2.bf16.msra.mxu0 %v1035
    %1550 = vmatprep.subr.bf16.mxu0 %v1032
    %1551 = vmatpush2.bf16.msra.mxu0 %v1031
    %1552 = vmatprep.subr.bf16.mxu0 %v1028
    %1553 = vmatpush2.bf16.msra.mxu0 %v1027
    %1554 = vmatprep.subr.bf16.mxu0 %v1024
    %1555 = vmatpush2.bf16.msra.mxu0 %v1023
    %1556 = vmatprep.subr.bf16.mxu0 %v1020
    %1557 = vmatpush2.bf16.msra.mxu0 %v1019
    %1558 = vmatprep.subr.bf16.mxu0 %v1016
    %1559 = vmatpush2.bf16.msra.mxu0 %v1015
    %1560 = vmatprep.mubr.bf16.mxu0 %v319
    %1561 = vmatmul.mubr.bf16.gmra.mxu0 %v318
    %v1562 = vpop.f32.mrf.mxu0
    %v1563 = vadd.f32 %v1520, %v1562
    %v1564 = vpop.f32.mrf.mxu0
    %v1565 = vadd.f32 %v1522, %v1564
    %v1566 = vpop.f32.mrf.mxu0
    %v1567 = vadd.f32 %v1524, %v1566
    %v1568 = vpop.f32.mrf.mxu0
    %v1569 = vadd.f32 %v1526, %v1568
    %1570 = vdwg.mxu0
    %1571 = vmatprep.subr.bf16.mxu0 %v1076
    %1572 = vmatpush1.bf16.msra.mxu0 %v1075
    %1573 = vmatprep.subr.bf16.mxu0 %v1072
    %1574 = vmatpush1.bf16.msra.mxu0 %v1071
    %1575 = vmatprep.subr.bf16.mxu0 %v1068
    %1576 = vmatpush1.bf16.msra.mxu0 %v1067
    %1577 = vmatprep.subr.bf16.mxu0 %v1064
    %1578 = vmatpush1.bf16.msra.mxu0 %v1063
    %1579 = vmatprep.subr.bf16.mxu0 %v1060
    %1580 = vmatpush1.bf16.msra.mxu0 %v1059
    %1581 = vmatprep.subr.bf16.mxu0 %v1056
    %1582 = vmatpush1.bf16.msra.mxu0 %v1055
    %1583 = vmatprep.subr.bf16.mxu0 %v1052
    %1584 = vmatpush1.bf16.msra.mxu0 %v1051
    %1585 = vmatprep.subr.bf16.mxu0 %v1048
    %1586 = vmatpush1.bf16.msra.mxu0 %v1047
    %1587 = vmatprep.subr.bf16.mxu0 %v1108
    %1588 = vmatpush2.bf16.msra.mxu0 %v1107
    %1589 = vmatprep.subr.bf16.mxu0 %v1104
    %1590 = vmatpush2.bf16.msra.mxu0 %v1103
    %1591 = vmatprep.subr.bf16.mxu0 %v1100
    %1592 = vmatpush2.bf16.msra.mxu0 %v1099
    %1593 = vmatprep.subr.bf16.mxu0 %v1096
    %1594 = vmatpush2.bf16.msra.mxu0 %v1095
    %1595 = vmatprep.subr.bf16.mxu0 %v1092
    %1596 = vmatpush2.bf16.msra.mxu0 %v1091
    %1597 = vmatprep.subr.bf16.mxu0 %v1088
    %1598 = vmatpush2.bf16.msra.mxu0 %v1087
    %1599 = vmatprep.subr.bf16.mxu0 %v1084
    %1600 = vmatpush2.bf16.msra.mxu0 %v1083
    %1601 = vmatprep.subr.bf16.mxu0 %v1080
    %1602 = vmatpush2.bf16.msra.mxu0 %v1079
    %1603 = vmatprep.mubr.bf16.mxu0 %v321
    %1604 = vmatmul.mubr.bf16.gmra.mxu0 %v320
    %v1605 = vpop.f32.mrf.mxu0
    %v1606 = vadd.f32 %v1563, %v1605
    %v1607 = vpop.f32.mrf.mxu0
    %v1608 = vadd.f32 %v1565, %v1607
    %v1609 = vpop.f32.mrf.mxu0
    %v1610 = vadd.f32 %v1567, %v1609
    %v1611 = vpop.f32.mrf.mxu0
    %v1612 = vadd.f32 %v1569, %v1611
    %1613 = vdwg.mxu0
    %1614 = vmatprep.subr.bf16.mxu0 0
    %1615 = vmatpush1.bf16.msra.mxu0 0
    %1616 = vmatprep.subr.bf16.mxu0 0
    %1617 = vmatpush1.bf16.msra.mxu0 0
    %1618 = vmatprep.subr.bf16.mxu0 0
    %1619 = vmatpush1.bf16.msra.mxu0 0
    %1620 = vmatprep.subr.bf16.mxu0 0
    %1621 = vmatpush1.bf16.msra.mxu0 0
    %1622 = vmatprep.subr.bf16.mxu0 0
    %1623 = vmatpush1.bf16.msra.mxu0 0
    %1624 = vmatprep.subr.bf16.mxu0 0
    %1625 = vmatpush1.bf16.msra.mxu0 0
    %1626 = vmatprep.subr.bf16.mxu0 0
    %1627 = vmatpush1.bf16.msra.mxu0 0
    %1628 = vmatprep.subr.bf16.mxu0 %v1112
    %1629 = vmatpush1.bf16.msra.mxu0 %v1111
    %1630 = vmatprep.subr.bf16.mxu0 0
    %1631 = vmatpush2.bf16.msra.mxu0 0
    %1632 = vmatprep.subr.bf16.mxu0 0
    %1633 = vmatpush2.bf16.msra.mxu0 0
    %1634 = vmatprep.subr.bf16.mxu0 0
    %1635 = vmatpush2.bf16.msra.mxu0 0
    %1636 = vmatprep.subr.bf16.mxu0 0
    %1637 = vmatpush2.bf16.msra.mxu0 0
    %1638 = vmatprep.subr.bf16.mxu0 0
    %1639 = vmatpush2.bf16.msra.mxu0 0
    %1640 = vmatprep.subr.bf16.mxu0 0
    %1641 = vmatpush2.bf16.msra.mxu0 0
    %1642 = vmatprep.subr.bf16.mxu0 0
    %1643 = vmatpush2.bf16.msra.mxu0 0
    %1644 = vmatprep.subr.bf16.mxu0 0
    %1645 = vmatpush2.bf16.msra.mxu0 0
    %1646 = vmatprep.mubr.bf16.mxu0 0
    %1647 = vmatmul.mubr.bf16.gmra.mxu0 %v1311
    %v1648 = vpop.f32.mrf.mxu0
    %v1649 = vadd.f32 %v1606, %v1648
    %v1650 = vpop.f32.mrf.mxu0
    %v1651 = vadd.f32 %v1608, %v1650
    %v1652 = vpop.f32.mrf.mxu0
    %v1653 = vadd.f32 %v1610, %v1652
    %v1654 = vpop.f32.mrf.mxu0
    %v1655 = vadd.f32 %v1612, %v1654
    %1656 = vdwg.mxu0
    %v1657 = vmax.f32 %v1477, 0.0
    %v1658 = vmax.f32 %v1479, 0.0
    %v1659 = vmax.f32 %v1649, 0.0
    %v1660 = vmax.f32 %v1651, 0.0
    %v1661 = vmax.f32 %v1481, 0.0
    %v1662 = vmax.f32 %v1483, 0.0
    %v1663 = vmax.f32 %v1653, 0.0
    %v1664 = vmax.f32 %v1655, 0.0
    %v1665 = vpack.c.bf16 %v1661, %v1657
    %v1666 = vpack.c.bf16 %v1662, %v1658
    %v1667 = vpack.c.bf16 %v1663, %v1659
    %v1668 = vpack.c.bf16 %v1664, %v1660
    %v1669 = vld [vmem:[#allocation4] sm:$0xff]
    %v1670 = vld [vmem:[#allocation4 + $0x8] sm:$0xff]
    %v1671 = vld [vmem:[#allocation4 + $0x10] sm:$0xff]
    %v1672 = vld [vmem:[#allocation4 + $0x18] sm:$0xff]
    %v1673 = vld [vmem:[#allocation4 + $0x20] sm:$0xff]
    %v1674 = vld [vmem:[#allocation4 + $0x28] sm:$0xff]
    %v1675 = vld [vmem:[#allocation4 + $0x30] sm:$0xff]
    %v1676 = vld [vmem:[#allocation4 + $0x38] sm:$0xff]
    %v1677 = vld [vmem:[#allocation4 + $0x40] sm:$0xff]
    %v1678 = vld [vmem:[#allocation4 + $0x48] sm:$0xff]
    %v1679 = vld [vmem:[#allocation4 + $0x50] sm:$0xff]
    %v1680 = vld [vmem:[#allocation4 + $0x58] sm:$0xff]
    %v1681 = vld [vmem:[#allocation4 + $0x60] sm:$0xff]
    %v1682 = vld [vmem:[#allocation4 + $0x68] sm:$0xff]
    %v1683 = vld [vmem:[#allocation4 + $0x70] sm:$0xff]
    %v1684 = vld [vmem:[#allocation4 + $0x78] sm:$0xff]
    %v1685 = vld [vmem:[#allocation4 + $0x80] sm:$0xff]
    %v1686 = vld [vmem:[#allocation4 + $0x88] sm:$0xff]
    %v1687 = vld [vmem:[#allocation4 + $0x90] sm:$0xff]
    %v1688 = vld [vmem:[#allocation4 + $0x98] sm:$0xff]
    %v1689 = vld [vmem:[#allocation4 + $0xa0] sm:$0xff]
    %v1690 = vld [vmem:[#allocation4 + $0xa8] sm:$0xff]
    %v1691 = vld [vmem:[#allocation4 + $0xb0] sm:$0xff]
    %v1692 = vld [vmem:[#allocation4 + $0xb8] sm:$0xff]
    %v1693 = vld [vmem:[#allocation4 + $0xc0] sm:$0xff]
    %v1694 = vld [vmem:[#allocation4 + $0xc8] sm:$0xff]
    %v1695 = vld [vmem:[#allocation4 + $0xd0] sm:$0xff]
    %v1696 = vld [vmem:[#allocation4 + $0xd8] sm:$0xff]
    %v1697 = vld [vmem:[#allocation4 + $0xe0] sm:$0xff]
    %v1698 = vld [vmem:[#allocation4 + $0xe8] sm:$0xff]
    %v1699 = vld [vmem:[#allocation4 + $0xf0] sm:$0xff]
    %v1700 = vld [vmem:[#allocation4 + $0xf8] sm:$0xff]
    %v1701 = vld [vmem:[#allocation4 + $0x100] sm:$0xff]
    %v1702 = vld [vmem:[#allocation4 + $0x108] sm:$0xff]
    %v1703 = vld [vmem:[#allocation4 + $0x110] sm:$0xff]
    %v1704 = vld [vmem:[#allocation4 + $0x118] sm:$0xff]
    %v1705 = vld [vmem:[#allocation4 + $0x120] sm:$0xff]
    %v1706 = vld [vmem:[#allocation4 + $0x128] sm:$0xff]
    %v1707 = vld [vmem:[#allocation4 + $0x130] sm:$0xff]
    %v1708 = vld [vmem:[#allocation4 + $0x138] sm:$0xff]
    %v1709 = vld [vmem:[#allocation4 + $0x140] sm:$0xff]
    %v1710 = vld [vmem:[#allocation4 + $0x148] sm:$0xff]
    %v1711 = vld [vmem:[#allocation4 + $0x150] sm:$0xff]
    %v1712 = vld [vmem:[#allocation4 + $0x158] sm:$0xff]
    %v1713 = vld [vmem:[#allocation4 + $0x160] sm:$0xff]
    %v1714 = vld [vmem:[#allocation4 + $0x168] sm:$0xff]
    %v1715 = vld [vmem:[#allocation4 + $0x170] sm:$0xff]
    %v1716 = vld [vmem:[#allocation4 + $0x178] sm:$0xff]
    %v1717 = vld [vmem:[#allocation4 + $0x180] sm:$0xff]
    %v1718 = vld [vmem:[#allocation4 + $0x188] sm:$0xff]
    %v1719 = vld [vmem:[#allocation4 + $0x190] sm:$0xff]
    %v1720 = vld [vmem:[#allocation4 + $0x198] sm:$0xff]
    %v1721 = vld [vmem:[#allocation4 + $0x1a0] sm:$0xff]
    %v1722 = vld [vmem:[#allocation4 + $0x1a8] sm:$0xff]
    %v1723 = vld [vmem:[#allocation4 + $0x1b0] sm:$0xff]
    %v1724 = vld [vmem:[#allocation4 + $0x1b8] sm:$0xff]
    %v1725 = vld [vmem:[#allocation4 + $0x1c0] sm:$0xff]
    %v1726 = vld [vmem:[#allocation4 + $0x1c8] sm:$0xff]
    %v1727 = vld [vmem:[#allocation4 + $0x1d0] sm:$0xff]
    %v1728 = vld [vmem:[#allocation4 + $0x1d8] sm:$0xff]
    %v1729 = vld [vmem:[#allocation4 + $0x1e0] sm:$0xff]
    %v1730 = vld [vmem:[#allocation4 + $0x1e8] sm:$0xff]
    %v1731 = vld [vmem:[#allocation4 + $0x1f0] sm:$0xff]
    %v1732 = vld [vmem:[#allocation4 + $0x1f8] sm:$0xff]
    %v1733 = vld [vmem:[#allocation4 + $0x200] sm:$0xff]
    %v1734 = vld [vmem:[#allocation4 + $0x208] sm:$0xff]
    %v1735 = vld [vmem:[#allocation4 + $0x210] sm:$0xff]
    %v1736 = vld [vmem:[#allocation4 + $0x218] sm:$0xff]
    %v1737 = vld [vmem:[#allocation4 + $0x220] sm:$0xff]
    %v1738 = vld [vmem:[#allocation4 + $0x228] sm:$0xff]
    %v1739 = vld [vmem:[#allocation4 + $0x230] sm:$0xff]
    %v1740 = vld [vmem:[#allocation4 + $0x238] sm:$0xff]
    %v1741 = vld [vmem:[#allocation4 + $0x240] sm:$0xff]
    %v1742 = vld [vmem:[#allocation4 + $0x248] sm:$0xff]
    %v1743 = vld [vmem:[#allocation4 + $0x250] sm:$0xff]
    %v1744 = vld [vmem:[#allocation4 + $0x258] sm:$0xff]
    %v1745 = vld [vmem:[#allocation4 + $0x260] sm:$0xff]
    %v1746 = vld [vmem:[#allocation4 + $0x268] sm:$0xff]
    %v1747 = vld [vmem:[#allocation4 + $0x270] sm:$0xff]
    %v1748 = vld [vmem:[#allocation4 + $0x278] sm:$0xff]
    %v1749 = vld [vmem:[#allocation4 + $0x280] sm:$0xff]
    %v1750 = vld [vmem:[#allocation4 + $0x288] sm:$0xff]
    %v1751 = vld [vmem:[#allocation4 + $0x290] sm:$0xff]
    %v1752 = vld [vmem:[#allocation4 + $0x298] sm:$0xff]
    %v1753 = vld [vmem:[#allocation4 + $0x2a0] sm:$0xff]
    %v1754 = vld [vmem:[#allocation4 + $0x2a8] sm:$0xff]
    %v1755 = vld [vmem:[#allocation4 + $0x2b0] sm:$0xff]
    %v1756 = vld [vmem:[#allocation4 + $0x2b8] sm:$0xff]
    %v1757 = vld [vmem:[#allocation4 + $0x2c0] sm:$0xff]
    %v1758 = vld [vmem:[#allocation4 + $0x2c8] sm:$0xff]
    %v1759 = vld [vmem:[#allocation4 + $0x2d0] sm:$0xff]
    %v1760 = vld [vmem:[#allocation4 + $0x2d8] sm:$0xff]
    %v1761 = vld [vmem:[#allocation4 + $0x2e0] sm:$0xff]
    %v1762 = vld [vmem:[#allocation4 + $0x2e8] sm:$0xff]
    %v1763 = vld [vmem:[#allocation4 + $0x2f0] sm:$0xff]
    %v1764 = vld [vmem:[#allocation4 + $0x2f8] sm:$0xff]
    %v1765 = vld [vmem:[#allocation4 + $0x300] sm:$0xff]
    %v1766 = vld [vmem:[#allocation4 + $0x308] sm:$0xff]
    %v1767 = vld [vmem:[#allocation4 + $0x310] sm:$0xff]
    %v1768 = vld [vmem:[#allocation4 + $0x318] sm:$0xff]
    %v1769 = vld [vmem:[#allocation4 + $0x320] sm:$0xff]
    %v1770 = vld [vmem:[#allocation4 + $0x328] sm:$0xff]
    %v1771 = vld [vmem:[#allocation4 + $0x330] sm:$0xff]
    %v1772 = vld [vmem:[#allocation4 + $0x338] sm:$0xff]
    %v1773 = vld [vmem:[#allocation4 + $0x340] sm:$0xff]
    %v1774 = vld [vmem:[#allocation4 + $0x348] sm:$0xff]
    %v1775 = vld [vmem:[#allocation4 + $0x350] sm:$0xff]
    %v1776 = vld [vmem:[#allocation4 + $0x358] sm:$0xff]
    %v1777 = vld [vmem:[#allocation4 + $0x360] sm:$0xff]
    %v1778 = vld [vmem:[#allocation4 + $0x368] sm:$0xff]
    %v1779 = vld [vmem:[#allocation4 + $0x370] sm:$0xff]
    %v1780 = vld [vmem:[#allocation4 + $0x378] sm:$0xff]
    %v1781 = vld [vmem:[#allocation4 + $0x380] sm:$0xff]
    %v1782 = vld [vmem:[#allocation4 + $0x388] sm:$0xff]
    %v1783 = vld [vmem:[#allocation4 + $0x390] sm:$0xff]
    %v1784 = vld [vmem:[#allocation4 + $0x398] sm:$0xff]
    %v1785 = vld [vmem:[#allocation4 + $0x3a0] sm:$0xff]
    %v1786 = vld [vmem:[#allocation4 + $0x3a8] sm:$0xff]
    %v1787 = vld [vmem:[#allocation4 + $0x3b0] sm:$0xff]
    %v1788 = vld [vmem:[#allocation4 + $0x3b8] sm:$0xff]
    %v1789 = vld [vmem:[#allocation4 + $0x3c0] sm:$0xff]
    %v1790 = vld [vmem:[#allocation4 + $0x3c8] sm:$0xff]
    %v1791 = vld [vmem:[#allocation4 + $0x3d0] sm:$0xff]
    %v1792 = vld [vmem:[#allocation4 + $0x3d8] sm:$0xff]
    %v1793 = vld [vmem:[#allocation4 + $0x3e0] sm:$0xff]
    %v1794 = vld [vmem:[#allocation4 + $0x3e8] sm:$0xff]
    %v1795 = vld [vmem:[#allocation4 + $0x3f0] sm:$0xff]
    %v1796 = vld [vmem:[#allocation4 + $0x3f8] sm:$0xff]
    %v1797 = vld [vmem:[%s4] sm:$0xf]
    %v1799 = vlaneseq
    %v1800 = vshrl.u32 %v1799, 7
    %v1801 = vsub.s32 0, %v1800
    %v1802 = vrot.slane %v1797, %v1801
    %v1803 = vlaneseq
    %v1804 = vshrl.u32 %v1803, 7
    %v1805 = vsub.s32 1, %v1804
    %v1806 = vrot.slane %v1797, %v1805
    %v1807 = vlaneseq
    %v1808 = vshrl.u32 %v1807, 7
    %v1809 = vsub.s32 2, %v1808
    %v1810 = vrot.slane %v1797, %v1809
    %v1811 = vlaneseq
    %v1812 = vshrl.u32 %v1811, 7
    %v1813 = vsub.s32 3, %v1812
    %v1814 = vrot.slane %v1797, %v1813
    %v1947 = vunpack.c.l.b16 %v1669
    %v1948 = vunpack.c.h.b16 %v1669
    %v1949 = vunpack.c.l.b16 %v1670
    %v1950 = vunpack.c.h.b16 %v1670
    %v1951 = vunpack.c.l.b16 %v1671
    %v1952 = vunpack.c.h.b16 %v1671
    %v1953 = vunpack.c.l.b16 %v1672
    %v1954 = vunpack.c.h.b16 %v1672
    %v1955 = vunpack.c.l.b16 %v1673
    %v1956 = vunpack.c.h.b16 %v1673
    %v1957 = vunpack.c.l.b16 %v1674
    %v1958 = vunpack.c.h.b16 %v1674
    %v1959 = vunpack.c.l.b16 %v1675
    %v1960 = vunpack.c.h.b16 %v1675
    %v1961 = vunpack.c.l.b16 %v1676
    %v1962 = vunpack.c.h.b16 %v1676
    %v1963 = vunpack.c.l.b16 %v1677
    %v1964 = vunpack.c.h.b16 %v1677
    %v1965 = vunpack.c.l.b16 %v1678
    %v1966 = vunpack.c.h.b16 %v1678
    %v1967 = vunpack.c.l.b16 %v1679
    %v1968 = vunpack.c.h.b16 %v1679
    %v1969 = vunpack.c.l.b16 %v1680
    %v1970 = vunpack.c.h.b16 %v1680
    %v1971 = vunpack.c.l.b16 %v1681
    %v1972 = vunpack.c.h.b16 %v1681
    %v1973 = vunpack.c.l.b16 %v1682
    %v1974 = vunpack.c.h.b16 %v1682
    %v1975 = vunpack.c.l.b16 %v1683
    %v1976 = vunpack.c.h.b16 %v1683
    %v1977 = vunpack.c.l.b16 %v1684
    %v1978 = vunpack.c.h.b16 %v1684
    %v1979 = vunpack.c.l.b16 %v1685
    %v1980 = vunpack.c.h.b16 %v1685
    %v1981 = vunpack.c.l.b16 %v1686
    %v1982 = vunpack.c.h.b16 %v1686
    %v1983 = vunpack.c.l.b16 %v1687
    %v1984 = vunpack.c.h.b16 %v1687
    %v1985 = vunpack.c.l.b16 %v1688
    %v1986 = vunpack.c.h.b16 %v1688
    %v1987 = vunpack.c.l.b16 %v1689
    %v1988 = vunpack.c.h.b16 %v1689
    %v1989 = vunpack.c.l.b16 %v1690
    %v1990 = vunpack.c.h.b16 %v1690
    %v1991 = vunpack.c.l.b16 %v1691
    %v1992 = vunpack.c.h.b16 %v1691
    %v1993 = vunpack.c.l.b16 %v1692
    %v1994 = vunpack.c.h.b16 %v1692
    %v1995 = vunpack.c.l.b16 %v1693
    %v1996 = vunpack.c.h.b16 %v1693
    %v1997 = vunpack.c.l.b16 %v1694
    %v1998 = vunpack.c.h.b16 %v1694
    %v1999 = vunpack.c.l.b16 %v1695
    %v2000 = vunpack.c.h.b16 %v1695
    %v2001 = vunpack.c.l.b16 %v1696
    %v2002 = vunpack.c.h.b16 %v1696
    %v2003 = vunpack.c.l.b16 %v1697
    %v2004 = vunpack.c.h.b16 %v1697
    %v2005 = vunpack.c.l.b16 %v1698
    %v2006 = vunpack.c.h.b16 %v1698
    %v2007 = vunpack.c.l.b16 %v1699
    %v2008 = vunpack.c.h.b16 %v1699
    %v2009 = vunpack.c.l.b16 %v1700
    %v2010 = vunpack.c.h.b16 %v1700
    %v2011 = vunpack.c.l.b16 %v1701
    %v2012 = vunpack.c.h.b16 %v1701
    %v2013 = vunpack.c.l.b16 %v1702
    %v2014 = vunpack.c.h.b16 %v1702
    %v2015 = vunpack.c.l.b16 %v1703
    %v2016 = vunpack.c.h.b16 %v1703
    %v2017 = vunpack.c.l.b16 %v1704
    %v2018 = vunpack.c.h.b16 %v1704
    %v2019 = vunpack.c.l.b16 %v1705
    %v2020 = vunpack.c.h.b16 %v1705
    %v2021 = vunpack.c.l.b16 %v1706
    %v2022 = vunpack.c.h.b16 %v1706
    %v2023 = vunpack.c.l.b16 %v1707
    %v2024 = vunpack.c.h.b16 %v1707
    %v2025 = vunpack.c.l.b16 %v1708
    %v2026 = vunpack.c.h.b16 %v1708
    %v2027 = vunpack.c.l.b16 %v1709
    %v2028 = vunpack.c.h.b16 %v1709
    %v2029 = vunpack.c.l.b16 %v1710
    %v2030 = vunpack.c.h.b16 %v1710
    %v2031 = vunpack.c.l.b16 %v1711
    %v2032 = vunpack.c.h.b16 %v1711
    %v2033 = vunpack.c.l.b16 %v1712
    %v2034 = vunpack.c.h.b16 %v1712
    %v2035 = vunpack.c.l.b16 %v1713
    %v2036 = vunpack.c.h.b16 %v1713
    %v2037 = vunpack.c.l.b16 %v1714
    %v2038 = vunpack.c.h.b16 %v1714
    %v2039 = vunpack.c.l.b16 %v1715
    %v2040 = vunpack.c.h.b16 %v1715
    %v2041 = vunpack.c.l.b16 %v1716
    %v2042 = vunpack.c.h.b16 %v1716
    %v2043 = vunpack.c.l.b16 %v1717
    %v2044 = vunpack.c.h.b16 %v1717
    %v2045 = vunpack.c.l.b16 %v1718
    %v2046 = vunpack.c.h.b16 %v1718
    %v2047 = vunpack.c.l.b16 %v1719
    %v2048 = vunpack.c.h.b16 %v1719
    %v2049 = vunpack.c.l.b16 %v1720
    %v2050 = vunpack.c.h.b16 %v1720
    %v2051 = vunpack.c.l.b16 %v1721
    %v2052 = vunpack.c.h.b16 %v1721
    %v2053 = vunpack.c.l.b16 %v1722
    %v2054 = vunpack.c.h.b16 %v1722
    %v2055 = vunpack.c.l.b16 %v1723
    %v2056 = vunpack.c.h.b16 %v1723
    %v2057 = vunpack.c.l.b16 %v1724
    %v2058 = vunpack.c.h.b16 %v1724
    %v2059 = vunpack.c.l.b16 %v1725
    %v2060 = vunpack.c.h.b16 %v1725
    %v2061 = vunpack.c.l.b16 %v1726
    %v2062 = vunpack.c.h.b16 %v1726
    %v2063 = vunpack.c.l.b16 %v1727
    %v2064 = vunpack.c.h.b16 %v1727
    %v2065 = vunpack.c.l.b16 %v1728
    %v2066 = vunpack.c.h.b16 %v1728
    %v2067 = vunpack.c.l.b16 %v1729
    %v2068 = vunpack.c.h.b16 %v1729
    %v2069 = vunpack.c.l.b16 %v1730
    %v2070 = vunpack.c.h.b16 %v1730
    %v2071 = vunpack.c.l.b16 %v1731
    %v2072 = vunpack.c.h.b16 %v1731
    %v2073 = vunpack.c.l.b16 %v1732
    %v2074 = vunpack.c.h.b16 %v1732
    %v2075 = vunpack.c.l.b16 %v1733
    %v2076 = vunpack.c.h.b16 %v1733
    %v2077 = vunpack.c.l.b16 %v1734
    %v2078 = vunpack.c.h.b16 %v1734
    %v2079 = vunpack.c.l.b16 %v1735
    %v2080 = vunpack.c.h.b16 %v1735
    %v2081 = vunpack.c.l.b16 %v1736
    %v2082 = vunpack.c.h.b16 %v1736
    %v2083 = vunpack.c.l.b16 %v1737
    %v2084 = vunpack.c.h.b16 %v1737
    %v2085 = vunpack.c.l.b16 %v1738
    %v2086 = vunpack.c.h.b16 %v1738
    %v2087 = vunpack.c.l.b16 %v1739
    %v2088 = vunpack.c.h.b16 %v1739
    %v2089 = vunpack.c.l.b16 %v1740
    %v2090 = vunpack.c.h.b16 %v1740
    %v2091 = vunpack.c.l.b16 %v1741
    %v2092 = vunpack.c.h.b16 %v1741
    %v2093 = vunpack.c.l.b16 %v1742
    %v2094 = vunpack.c.h.b16 %v1742
    %v2095 = vunpack.c.l.b16 %v1743
    %v2096 = vunpack.c.h.b16 %v1743
    %v2097 = vunpack.c.l.b16 %v1744
    %v2098 = vunpack.c.h.b16 %v1744
    %v2099 = vunpack.c.l.b16 %v1745
    %v2100 = vunpack.c.h.b16 %v1745
    %v2101 = vunpack.c.l.b16 %v1746
    %v2102 = vunpack.c.h.b16 %v1746
    %v2103 = vunpack.c.l.b16 %v1747
    %v2104 = vunpack.c.h.b16 %v1747
    %v2105 = vunpack.c.l.b16 %v1748
    %v2106 = vunpack.c.h.b16 %v1748
    %v2107 = vunpack.c.l.b16 %v1749
    %v2108 = vunpack.c.h.b16 %v1749
    %v2109 = vunpack.c.l.b16 %v1750
    %v2110 = vunpack.c.h.b16 %v1750
    %v2111 = vunpack.c.l.b16 %v1751
    %v2112 = vunpack.c.h.b16 %v1751
    %v2113 = vunpack.c.l.b16 %v1752
    %v2114 = vunpack.c.h.b16 %v1752
    %v2115 = vunpack.c.l.b16 %v1753
    %v2116 = vunpack.c.h.b16 %v1753
    %v2117 = vunpack.c.l.b16 %v1754
    %v2118 = vunpack.c.h.b16 %v1754
    %v2119 = vunpack.c.l.b16 %v1755
    %v2120 = vunpack.c.h.b16 %v1755
    %v2121 = vunpack.c.l.b16 %v1756
    %v2122 = vunpack.c.h.b16 %v1756
    %v2123 = vunpack.c.l.b16 %v1757
    %v2124 = vunpack.c.h.b16 %v1757
    %v2125 = vunpack.c.l.b16 %v1758
    %v2126 = vunpack.c.h.b16 %v1758
    %v2127 = vunpack.c.l.b16 %v1759
    %v2128 = vunpack.c.h.b16 %v1759
    %v2129 = vunpack.c.l.b16 %v1760
    %v2130 = vunpack.c.h.b16 %v1760
    %v2131 = vunpack.c.l.b16 %v1761
    %v2132 = vunpack.c.h.b16 %v1761
    %v2133 = vunpack.c.l.b16 %v1762
    %v2134 = vunpack.c.h.b16 %v1762
    %v2135 = vunpack.c.l.b16 %v1763
    %v2136 = vunpack.c.h.b16 %v1763
    %v2137 = vunpack.c.l.b16 %v1764
    %v2138 = vunpack.c.h.b16 %v1764
    %v2139 = vunpack.c.l.b16 %v1765
    %v2140 = vunpack.c.h.b16 %v1765
    %v2141 = vunpack.c.l.b16 %v1766
    %v2142 = vunpack.c.h.b16 %v1766
    %v2143 = vunpack.c.l.b16 %v1767
    %v2144 = vunpack.c.h.b16 %v1767
    %v2145 = vunpack.c.l.b16 %v1768
    %v2146 = vunpack.c.h.b16 %v1768
    %v2147 = vunpack.c.l.b16 %v1769
    %v2148 = vunpack.c.h.b16 %v1769
    %v2149 = vunpack.c.l.b16 %v1770
    %v2150 = vunpack.c.h.b16 %v1770
    %v2151 = vunpack.c.l.b16 %v1771
    %v2152 = vunpack.c.h.b16 %v1771
    %v2153 = vunpack.c.l.b16 %v1772
    %v2154 = vunpack.c.h.b16 %v1772
    %v2155 = vunpack.c.l.b16 %v1773
    %v2156 = vunpack.c.h.b16 %v1773
    %v2157 = vunpack.c.l.b16 %v1774
    %v2158 = vunpack.c.h.b16 %v1774
    %v2159 = vunpack.c.l.b16 %v1775
    %v2160 = vunpack.c.h.b16 %v1775
    %v2161 = vunpack.c.l.b16 %v1776
    %v2162 = vunpack.c.h.b16 %v1776
    %v2163 = vunpack.c.l.b16 %v1777
    %v2164 = vunpack.c.h.b16 %v1777
    %v2165 = vunpack.c.l.b16 %v1778
    %v2166 = vunpack.c.h.b16 %v1778
    %v2167 = vunpack.c.l.b16 %v1779
    %v2168 = vunpack.c.h.b16 %v1779
    %v2169 = vunpack.c.l.b16 %v1780
    %v2170 = vunpack.c.h.b16 %v1780
    %v2171 = vunpack.c.l.b16 %v1781
    %v2172 = vunpack.c.h.b16 %v1781
    %v2173 = vunpack.c.l.b16 %v1782
    %v2174 = vunpack.c.h.b16 %v1782
    %v2175 = vunpack.c.l.b16 %v1783
    %v2176 = vunpack.c.h.b16 %v1783
    %v2177 = vunpack.c.l.b16 %v1784
    %v2178 = vunpack.c.h.b16 %v1784
    %v2179 = vunpack.c.l.b16 %v1785
    %v2180 = vunpack.c.h.b16 %v1785
    %v2181 = vunpack.c.l.b16 %v1786
    %v2182 = vunpack.c.h.b16 %v1786
    %v2183 = vunpack.c.l.b16 %v1787
    %v2184 = vunpack.c.h.b16 %v1787
    %v2185 = vunpack.c.l.b16 %v1788
    %v2186 = vunpack.c.h.b16 %v1788
    %v2187 = vunpack.c.l.b16 %v1789
    %v2188 = vunpack.c.h.b16 %v1789
    %v2189 = vunpack.c.l.b16 %v1790
    %v2190 = vunpack.c.h.b16 %v1790
    %v2191 = vunpack.c.l.b16 %v1791
    %v2192 = vunpack.c.h.b16 %v1791
    %v2193 = vunpack.c.l.b16 %v1792
    %v2194 = vunpack.c.h.b16 %v1792
    %v2195 = vunpack.c.l.b16 %v1793
    %v2196 = vunpack.c.h.b16 %v1793
    %v2197 = vunpack.c.l.b16 %v1794
    %v2198 = vunpack.c.h.b16 %v1794
    %v2199 = vunpack.c.l.b16 %v1795
    %v2200 = vunpack.c.h.b16 %v1795
    %v2201 = vunpack.c.l.b16 %v1796
    %v2202 = vunpack.c.h.b16 %v1796
    %v2203 = vpack.c.b16 %v1951, %v1947
    %v2204 = vpack.c.b16 %v1952, %v1948
    %v2205 = vpack.c.b16 %v1953, %v1949
    %v2206 = vpack.c.b16 %v1954, %v1950
    %v2207 = vpack.c.b16 %v1959, %v1955
    %v2208 = vpack.c.b16 %v1960, %v1956
    %v2209 = vpack.c.b16 %v1961, %v1957
    %v2210 = vpack.c.b16 %v1962, %v1958
    %v2211 = vpack.c.b16 %v1967, %v1963
    %v2212 = vpack.c.b16 %v1968, %v1964
    %v2213 = vpack.c.b16 %v1969, %v1965
    %v2214 = vpack.c.b16 %v1970, %v1966
    %v2215 = vpack.c.b16 %v1975, %v1971
    %v2216 = vpack.c.b16 %v1976, %v1972
    %v2217 = vpack.c.b16 %v1977, %v1973
    %v2218 = vpack.c.b16 %v1978, %v1974
    %v2219 = vpack.c.b16 %v1983, %v1979
    %v2220 = vpack.c.b16 %v1984, %v1980
    %v2221 = vpack.c.b16 %v1985, %v1981
    %v2222 = vpack.c.b16 %v1986, %v1982
    %v2223 = vpack.c.b16 %v1991, %v1987
    %v2224 = vpack.c.b16 %v1992, %v1988
    %v2225 = vpack.c.b16 %v1993, %v1989
    %v2226 = vpack.c.b16 %v1994, %v1990
    %v2227 = vpack.c.b16 %v1999, %v1995
    %v2228 = vpack.c.b16 %v2000, %v1996
    %v2229 = vpack.c.b16 %v2001, %v1997
    %v2230 = vpack.c.b16 %v2002, %v1998
    %v2231 = vpack.c.b16 %v2007, %v2003
    %v2232 = vpack.c.b16 %v2008, %v2004
    %v2233 = vpack.c.b16 %v2009, %v2005
    %v2234 = vpack.c.b16 %v2010, %v2006
    %v2235 = vpack.c.b16 %v2015, %v2011
    %v2236 = vpack.c.b16 %v2016, %v2012
    %v2237 = vpack.c.b16 %v2017, %v2013
    %v2238 = vpack.c.b16 %v2018, %v2014
    %v2239 = vpack.c.b16 %v2023, %v2019
    %v2240 = vpack.c.b16 %v2024, %v2020
    %v2241 = vpack.c.b16 %v2025, %v2021
    %v2242 = vpack.c.b16 %v2026, %v2022
    %v2243 = vpack.c.b16 %v2031, %v2027
    %v2244 = vpack.c.b16 %v2032, %v2028
    %v2245 = vpack.c.b16 %v2033, %v2029
    %v2246 = vpack.c.b16 %v2034, %v2030
    %v2247 = vpack.c.b16 %v2039, %v2035
    %v2248 = vpack.c.b16 %v2040, %v2036
    %v2249 = vpack.c.b16 %v2041, %v2037
    %v2250 = vpack.c.b16 %v2042, %v2038
    %v2251 = vpack.c.b16 %v2047, %v2043
    %v2252 = vpack.c.b16 %v2048, %v2044
    %v2253 = vpack.c.b16 %v2049, %v2045
    %v2254 = vpack.c.b16 %v2050, %v2046
    %v2255 = vpack.c.b16 %v2055, %v2051
    %v2256 = vpack.c.b16 %v2056, %v2052
    %v2257 = vpack.c.b16 %v2057, %v2053
    %v2258 = vpack.c.b16 %v2058, %v2054
    %v2259 = vpack.c.b16 %v2063, %v2059
    %v2260 = vpack.c.b16 %v2064, %v2060
    %v2261 = vpack.c.b16 %v2065, %v2061
    %v2262 = vpack.c.b16 %v2066, %v2062
    %v2263 = vpack.c.b16 %v2071, %v2067
    %v2264 = vpack.c.b16 %v2072, %v2068
    %v2265 = vpack.c.b16 %v2073, %v2069
    %v2266 = vpack.c.b16 %v2074, %v2070
    %v2267 = vpack.c.b16 %v2079, %v2075
    %v2268 = vpack.c.b16 %v2080, %v2076
    %v2269 = vpack.c.b16 %v2081, %v2077
    %v2270 = vpack.c.b16 %v2082, %v2078
    %v2271 = vpack.c.b16 %v2087, %v2083
    %v2272 = vpack.c.b16 %v2088, %v2084
    %v2273 = vpack.c.b16 %v2089, %v2085
    %v2274 = vpack.c.b16 %v2090, %v2086
    %v2275 = vpack.c.b16 %v2095, %v2091
    %v2276 = vpack.c.b16 %v2096, %v2092
    %v2277 = vpack.c.b16 %v2097, %v2093
    %v2278 = vpack.c.b16 %v2098, %v2094
    %v2279 = vpack.c.b16 %v2103, %v2099
    %v2280 = vpack.c.b16 %v2104, %v2100
    %v2281 = vpack.c.b16 %v2105, %v2101
    %v2282 = vpack.c.b16 %v2106, %v2102
    %v2283 = vpack.c.b16 %v2111, %v2107
    %v2284 = vpack.c.b16 %v2112, %v2108
    %v2285 = vpack.c.b16 %v2113, %v2109
    %v2286 = vpack.c.b16 %v2114, %v2110
    %v2287 = vpack.c.b16 %v2119, %v2115
    %v2288 = vpack.c.b16 %v2120, %v2116
    %v2289 = vpack.c.b16 %v2121, %v2117
    %v2290 = vpack.c.b16 %v2122, %v2118
    %v2291 = vpack.c.b16 %v2127, %v2123
    %v2292 = vpack.c.b16 %v2128, %v2124
    %v2293 = vpack.c.b16 %v2129, %v2125
    %v2294 = vpack.c.b16 %v2130, %v2126
    %v2295 = vpack.c.b16 %v2135, %v2131
    %v2296 = vpack.c.b16 %v2136, %v2132
    %v2297 = vpack.c.b16 %v2137, %v2133
    %v2298 = vpack.c.b16 %v2138, %v2134
    %v2299 = vpack.c.b16 %v2143, %v2139
    %v2300 = vpack.c.b16 %v2144, %v2140
    %v2301 = vpack.c.b16 %v2145, %v2141
    %v2302 = vpack.c.b16 %v2146, %v2142
    %v2303 = vpack.c.b16 %v2151, %v2147
    %v2304 = vpack.c.b16 %v2152, %v2148
    %v2305 = vpack.c.b16 %v2153, %v2149
    %v2306 = vpack.c.b16 %v2154, %v2150
    %v2307 = vpack.c.b16 %v2159, %v2155
    %v2308 = vpack.c.b16 %v2160, %v2156
    %v2309 = vpack.c.b16 %v2161, %v2157
    %v2310 = vpack.c.b16 %v2162, %v2158
    %v2311 = vpack.c.b16 %v2167, %v2163
    %v2312 = vpack.c.b16 %v2168, %v2164
    %v2313 = vpack.c.b16 %v2169, %v2165
    %v2314 = vpack.c.b16 %v2170, %v2166
    %v2315 = vpack.c.b16 %v2175, %v2171
    %v2316 = vpack.c.b16 %v2176, %v2172
    %v2317 = vpack.c.b16 %v2177, %v2173
    %v2318 = vpack.c.b16 %v2178, %v2174
    %v2319 = vpack.c.b16 %v2183, %v2179
    %v2320 = vpack.c.b16 %v2184, %v2180
    %v2321 = vpack.c.b16 %v2185, %v2181
    %v2322 = vpack.c.b16 %v2186, %v2182
    %v2323 = vpack.c.b16 %v2191, %v2187
    %v2324 = vpack.c.b16 %v2192, %v2188
    %v2325 = vpack.c.b16 %v2193, %v2189
    %v2326 = vpack.c.b16 %v2194, %v2190
    %v2327 = vpack.c.b16 %v2199, %v2195
    %v2328 = vpack.c.b16 %v2200, %v2196
    %v2329 = vpack.c.b16 %v2201, %v2197
    %v2330 = vpack.c.b16 %v2202, %v2198
    %2459 = vmatprep.subr.bf16.mxu0 %v2232
    %2460 = vmatpush1.bf16.msra.mxu0 %v2231
    %2461 = vmatprep.subr.bf16.mxu0 %v2228
    %2462 = vmatpush1.bf16.msra.mxu0 %v2227
    %2463 = vmatprep.subr.bf16.mxu0 %v2224
    %2464 = vmatpush1.bf16.msra.mxu0 %v2223
    %2465 = vmatprep.subr.bf16.mxu0 %v2220
    %2466 = vmatpush1.bf16.msra.mxu0 %v2219
    %2467 = vmatprep.subr.bf16.mxu0 %v2216
    %2468 = vmatpush1.bf16.msra.mxu0 %v2215
    %2469 = vmatprep.subr.bf16.mxu0 %v2212
    %2470 = vmatpush1.bf16.msra.mxu0 %v2211
    %2471 = vmatprep.subr.bf16.mxu0 %v2208
    %2472 = vmatpush1.bf16.msra.mxu0 %v2207
    %2473 = vmatprep.subr.bf16.mxu0 %v2204
    %2474 = vmatpush1.bf16.msra.mxu0 %v2203
    %2475 = vmatprep.subr.bf16.mxu0 %v2264
    %2476 = vmatpush2.bf16.msra.mxu0 %v2263
    %2477 = vmatprep.subr.bf16.mxu0 %v2260
    %2478 = vmatpush2.bf16.msra.mxu0 %v2259
    %2479 = vmatprep.subr.bf16.mxu0 %v2256
    %2480 = vmatpush2.bf16.msra.mxu0 %v2255
    %2481 = vmatprep.subr.bf16.mxu0 %v2252
    %2482 = vmatpush2.bf16.msra.mxu0 %v2251
    %2483 = vmatprep.subr.bf16.mxu0 %v2248
    %2484 = vmatpush2.bf16.msra.mxu0 %v2247
    %2485 = vmatprep.subr.bf16.mxu0 %v2244
    %2486 = vmatpush2.bf16.msra.mxu0 %v2243
    %2487 = vmatprep.subr.bf16.mxu0 %v2240
    %2488 = vmatpush2.bf16.msra.mxu0 %v2239
    %2489 = vmatprep.subr.bf16.mxu0 %v2236
    %2490 = vmatpush2.bf16.msra.mxu0 %v2235
    %2491 = vmatprep.mubr.bf16.mxu0 %v1666
    %2492 = vmatmul.mubr.bf16.gmra.mxu0 %v1665
    %v2493 = vpop.f32.mrf.mxu0
    %v2494 = vadd.f32 %v1802, %v2493
    %v2495 = vpop.f32.mrf.mxu0
    %v2496 = vadd.f32 %v1806, %v2495
    %v2497 = vpop.f32.mrf.mxu0
    %v2498 = vadd.f32 %v1802, %v2497
    %v2499 = vpop.f32.mrf.mxu0
    %v2500 = vadd.f32 %v1806, %v2499
    %2501 = vdwg.mxu0
    %2502 = vmatprep.subr.bf16.mxu0 %v2296
    %2503 = vmatpush1.bf16.msra.mxu0 %v2295
    %2504 = vmatprep.subr.bf16.mxu0 %v2292
    %2505 = vmatpush1.bf16.msra.mxu0 %v2291
    %2506 = vmatprep.subr.bf16.mxu0 %v2288
    %2507 = vmatpush1.bf16.msra.mxu0 %v2287
    %2508 = vmatprep.subr.bf16.mxu0 %v2284
    %2509 = vmatpush1.bf16.msra.mxu0 %v2283
    %2510 = vmatprep.subr.bf16.mxu0 %v2280
    %2511 = vmatpush1.bf16.msra.mxu0 %v2279
    %2512 = vmatprep.subr.bf16.mxu0 %v2276
    %2513 = vmatpush1.bf16.msra.mxu0 %v2275
    %2514 = vmatprep.subr.bf16.mxu0 %v2272
    %2515 = vmatpush1.bf16.msra.mxu0 %v2271
    %2516 = vmatprep.subr.bf16.mxu0 %v2268
    %2517 = vmatpush1.bf16.msra.mxu0 %v2267
    %2518 = vmatprep.subr.bf16.mxu0 %v2328
    %2519 = vmatpush2.bf16.msra.mxu0 %v2327
    %2520 = vmatprep.subr.bf16.mxu0 %v2324
    %2521 = vmatpush2.bf16.msra.mxu0 %v2323
    %2522 = vmatprep.subr.bf16.mxu0 %v2320
    %2523 = vmatpush2.bf16.msra.mxu0 %v2319
    %2524 = vmatprep.subr.bf16.mxu0 %v2316
    %2525 = vmatpush2.bf16.msra.mxu0 %v2315
    %2526 = vmatprep.subr.bf16.mxu0 %v2312
    %2527 = vmatpush2.bf16.msra.mxu0 %v2311
    %2528 = vmatprep.subr.bf16.mxu0 %v2308
    %2529 = vmatpush2.bf16.msra.mxu0 %v2307
    %2530 = vmatprep.subr.bf16.mxu0 %v2304
    %2531 = vmatpush2.bf16.msra.mxu0 %v2303
    %2532 = vmatprep.subr.bf16.mxu0 %v2300
    %2533 = vmatpush2.bf16.msra.mxu0 %v2299
    %2534 = vmatprep.mubr.bf16.mxu0 %v1668
    %2535 = vmatmul.mubr.bf16.gmra.mxu0 %v1667
    %v2536 = vpop.f32.mrf.mxu0
    %v2537 = vadd.f32 %v2494, %v2536
    %v2538 = vpop.f32.mrf.mxu0
    %v2539 = vadd.f32 %v2496, %v2538
    %v2540 = vpop.f32.mrf.mxu0
    %v2541 = vadd.f32 %v2498, %v2540
    %v2542 = vpop.f32.mrf.mxu0
    %v2543 = vadd.f32 %v2500, %v2542
    %2544 = vdwg.mxu0
    %2545 = vmatprep.subr.bf16.mxu0 %v2234
    %2546 = vmatpush1.bf16.msra.mxu0 %v2233
    %2547 = vmatprep.subr.bf16.mxu0 %v2230
    %2548 = vmatpush1.bf16.msra.mxu0 %v2229
    %2549 = vmatprep.subr.bf16.mxu0 %v2226
    %2550 = vmatpush1.bf16.msra.mxu0 %v2225
    %2551 = vmatprep.subr.bf16.mxu0 %v2222
    %2552 = vmatpush1.bf16.msra.mxu0 %v2221
    %2553 = vmatprep.subr.bf16.mxu0 %v2218
    %2554 = vmatpush1.bf16.msra.mxu0 %v2217
    %2555 = vmatprep.subr.bf16.mxu0 %v2214
    %2556 = vmatpush1.bf16.msra.mxu0 %v2213
    %2557 = vmatprep.subr.bf16.mxu0 %v2210
    %2558 = vmatpush1.bf16.msra.mxu0 %v2209
    %2559 = vmatprep.subr.bf16.mxu0 %v2206
    %2560 = vmatpush1.bf16.msra.mxu0 %v2205
    %2561 = vmatprep.subr.bf16.mxu0 %v2266
    %2562 = vmatpush2.bf16.msra.mxu0 %v2265
    %2563 = vmatprep.subr.bf16.mxu0 %v2262
    %2564 = vmatpush2.bf16.msra.mxu0 %v2261
    %2565 = vmatprep.subr.bf16.mxu0 %v2258
    %2566 = vmatpush2.bf16.msra.mxu0 %v2257
    %2567 = vmatprep.subr.bf16.mxu0 %v2254
    %2568 = vmatpush2.bf16.msra.mxu0 %v2253
    %2569 = vmatprep.subr.bf16.mxu0 %v2250
    %2570 = vmatpush2.bf16.msra.mxu0 %v2249
    %2571 = vmatprep.subr.bf16.mxu0 %v2246
    %2572 = vmatpush2.bf16.msra.mxu0 %v2245
    %2573 = vmatprep.subr.bf16.mxu0 %v2242
    %2574 = vmatpush2.bf16.msra.mxu0 %v2241
    %2575 = vmatprep.subr.bf16.mxu0 %v2238
    %2576 = vmatpush2.bf16.msra.mxu0 %v2237
    %2577 = vmatprep.mubr.bf16.mxu0 %v1666
    %2578 = vmatmul.mubr.bf16.gmra.mxu0 %v1665
    %v2579 = vpop.f32.mrf.mxu0
    %v2580 = vadd.f32 %v1810, %v2579
    %v2581 = vpop.f32.mrf.mxu0
    %v2582 = vadd.f32 %v1814, %v2581
    %v2583 = vpop.f32.mrf.mxu0
    %v2584 = vadd.f32 %v1810, %v2583
    %v2585 = vpop.f32.mrf.mxu0
    %v2586 = vadd.f32 %v1814, %v2585
    %2587 = vdwg.mxu0
    %2588 = vmatprep.subr.bf16.mxu0 %v2298
    %2589 = vmatpush1.bf16.msra.mxu0 %v2297
    %2590 = vmatprep.subr.bf16.mxu0 %v2294
    %2591 = vmatpush1.bf16.msra.mxu0 %v2293
    %2592 = vmatprep.subr.bf16.mxu0 %v2290
    %2593 = vmatpush1.bf16.msra.mxu0 %v2289
    %2594 = vmatprep.subr.bf16.mxu0 %v2286
    %2595 = vmatpush1.bf16.msra.mxu0 %v2285
    %2596 = vmatprep.subr.bf16.mxu0 %v2282
    %2597 = vmatpush1.bf16.msra.mxu0 %v2281
    %2598 = vmatprep.subr.bf16.mxu0 %v2278
    %2599 = vmatpush1.bf16.msra.mxu0 %v2277
    %2600 = vmatprep.subr.bf16.mxu0 %v2274
    %2601 = vmatpush1.bf16.msra.mxu0 %v2273
    %2602 = vmatprep.subr.bf16.mxu0 %v2270
    %2603 = vmatpush1.bf16.msra.mxu0 %v2269
    %2604 = vmatprep.subr.bf16.mxu0 %v2330
    %2605 = vmatpush2.bf16.msra.mxu0 %v2329
    %2606 = vmatprep.subr.bf16.mxu0 %v2326
    %2607 = vmatpush2.bf16.msra.mxu0 %v2325
    %2608 = vmatprep.subr.bf16.mxu0 %v2322
    %2609 = vmatpush2.bf16.msra.mxu0 %v2321
    %2610 = vmatprep.subr.bf16.mxu0 %v2318
    %2611 = vmatpush2.bf16.msra.mxu0 %v2317
    %2612 = vmatprep.subr.bf16.mxu0 %v2314
    %2613 = vmatpush2.bf16.msra.mxu0 %v2313
    %2614 = vmatprep.subr.bf16.mxu0 %v2310
    %2615 = vmatpush2.bf16.msra.mxu0 %v2309
    %2616 = vmatprep.subr.bf16.mxu0 %v2306
    %2617 = vmatpush2.bf16.msra.mxu0 %v2305
    %2618 = vmatprep.subr.bf16.mxu0 %v2302
    %2619 = vmatpush2.bf16.msra.mxu0 %v2301
    %2620 = vmatprep.mubr.bf16.mxu0 %v1668
    %2621 = vmatmul.mubr.bf16.gmra.mxu0 %v1667
    %v2622 = vpop.f32.mrf.mxu0
    %v2623 = vadd.f32 %v2580, %v2622
    %v2624 = vpop.f32.mrf.mxu0
    %v2625 = vadd.f32 %v2582, %v2624
    %v2626 = vpop.f32.mrf.mxu0
    %v2627 = vadd.f32 %v2584, %v2626
    %v2628 = vpop.f32.mrf.mxu0
    %v2629 = vadd.f32 %v2586, %v2628
    %2630 = vdwg.mxu0
    %v2631 = vmax.f32 %v2537, 0.0
    %v2632 = vmax.f32 %v2539, 0.0
    %v2633 = vmax.f32 %v2623, 0.0
    %v2634 = vmax.f32 %v2625, 0.0
    %v2635 = vmax.f32 %v2541, 0.0
    %v2636 = vmax.f32 %v2543, 0.0
    %v2637 = vmax.f32 %v2627, 0.0
    %v2638 = vmax.f32 %v2629, 0.0
    %v2639 = vpack.c.bf16 %v2635, %v2631
    %v2640 = vpack.c.bf16 %v2636, %v2632
    %v2641 = vpack.c.bf16 %v2637, %v2633
    %v2642 = vpack.c.bf16 %v2638, %v2634
    %v2643 = vld [vmem:[#allocation6] sm:$0xf]
    %v2644 = vld [vmem:[#allocation6 + $0x4] sm:$0xf]
    %v2645 = vld [vmem:[#allocation6 + $0x8] sm:$0xf]
    %v2646 = vld [vmem:[#allocation6 + $0xc] sm:$0xf]
    %v2647 = vld [vmem:[#allocation6 + $0x10] sm:$0xf]
    %v2648 = vld [vmem:[#allocation6 + $0x14] sm:$0xf]
    %v2649 = vld [vmem:[#allocation6 + $0x18] sm:$0xf]
    %v2650 = vld [vmem:[#allocation6 + $0x1c] sm:$0xf]
    %v2651 = vld [vmem:[#allocation6 + $0x20] sm:$0xf]
    %v2652 = vld [vmem:[#allocation6 + $0x24] sm:$0xf]
    %v2653 = vld [vmem:[#allocation6 + $0x28] sm:$0xf]
    %v2654 = vld [vmem:[#allocation6 + $0x2c] sm:$0xf]
    %v2655 = vld [vmem:[#allocation6 + $0x30] sm:$0xf]
    %v2656 = vld [vmem:[#allocation6 + $0x34] sm:$0xf]
    %v2657 = vld [vmem:[#allocation6 + $0x38] sm:$0xf]
    %v2658 = vld [vmem:[#allocation6 + $0x3c] sm:$0xf]
    %v2659 = vld [vmem:[#allocation6 + $0x40] sm:$0xf]
    %v2660 = vld [vmem:[#allocation6 + $0x44] sm:$0xf]
    %v2661 = vld [vmem:[#allocation6 + $0x48] sm:$0xf]
    %v2662 = vld [vmem:[#allocation6 + $0x4c] sm:$0xf]
    %v2663 = vld [vmem:[#allocation6 + $0x50] sm:$0xf]
    %v2664 = vld [vmem:[#allocation6 + $0x54] sm:$0xf]
    %v2665 = vld [vmem:[#allocation6 + $0x58] sm:$0xf]
    %v2666 = vld [vmem:[#allocation6 + $0x5c] sm:$0xf]
    %v2667 = vld [vmem:[#allocation6 + $0x60] sm:$0xf]
    %v2668 = vld [vmem:[#allocation6 + $0x64] sm:$0xf]
    %v2669 = vld [vmem:[#allocation6 + $0x68] sm:$0xf]
    %v2670 = vld [vmem:[#allocation6 + $0x6c] sm:$0xf]
    %v2671 = vld [vmem:[#allocation6 + $0x70] sm:$0xf]
    %v2672 = vld [vmem:[#allocation6 + $0x74] sm:$0xf]
    %v2673 = vld [vmem:[#allocation6 + $0x78] sm:$0xf]
    %v2674 = vld [vmem:[#allocation6 + $0x7c] sm:$0xf]
    %v2675 = vld [vmem:[#allocation6 + $0x80] sm:$0xf]
    %v2676 = vld [vmem:[#allocation6 + $0x84] sm:$0xf]
    %v2677 = vld [vmem:[#allocation6 + $0x88] sm:$0xf]
    %v2678 = vld [vmem:[#allocation6 + $0x8c] sm:$0xf]
    %v2679 = vld [vmem:[#allocation6 + $0x90] sm:$0xf]
    %v2680 = vld [vmem:[#allocation6 + $0x94] sm:$0xf]
    %v2681 = vld [vmem:[#allocation6 + $0x98] sm:$0xf]
    %v2682 = vld [vmem:[#allocation6 + $0x9c] sm:$0xf]
    %v2683 = vld [vmem:[#allocation6 + $0xa0] sm:$0xf]
    %v2684 = vld [vmem:[#allocation6 + $0xa4] sm:$0xf]
    %v2685 = vld [vmem:[#allocation6 + $0xa8] sm:$0xf]
    %v2686 = vld [vmem:[#allocation6 + $0xac] sm:$0xf]
    %v2687 = vld [vmem:[#allocation6 + $0xb0] sm:$0xf]
    %v2688 = vld [vmem:[#allocation6 + $0xb4] sm:$0xf]
    %v2689 = vld [vmem:[#allocation6 + $0xb8] sm:$0xf]
    %v2690 = vld [vmem:[#allocation6 + $0xbc] sm:$0xf]
    %v2691 = vld [vmem:[#allocation6 + $0xc0] sm:$0xf]
    %v2692 = vld [vmem:[#allocation6 + $0xc4] sm:$0xf]
    %v2693 = vld [vmem:[#allocation6 + $0xc8] sm:$0xf]
    %v2694 = vld [vmem:[#allocation6 + $0xcc] sm:$0xf]
    %v2695 = vld [vmem:[#allocation6 + $0xd0] sm:$0xf]
    %v2696 = vld [vmem:[#allocation6 + $0xd4] sm:$0xf]
    %v2697 = vld [vmem:[#allocation6 + $0xd8] sm:$0xf]
    %v2698 = vld [vmem:[#allocation6 + $0xdc] sm:$0xf]
    %v2699 = vld [vmem:[#allocation6 + $0xe0] sm:$0xf]
    %v2700 = vld [vmem:[#allocation6 + $0xe4] sm:$0xf]
    %v2701 = vld [vmem:[#allocation6 + $0xe8] sm:$0xf]
    %v2702 = vld [vmem:[#allocation6 + $0xec] sm:$0xf]
    %v2703 = vld [vmem:[#allocation6 + $0xf0] sm:$0xf]
    %v2704 = vld [vmem:[#allocation6 + $0xf4] sm:$0xf]
    %v2705 = vld [vmem:[#allocation6 + $0xf8] sm:$0xf]
    %v2706 = vld [vmem:[#allocation6 + $0xfc] sm:$0xf]
    %v2707 = vld [vmem:[%s6] sm:$0x1]
    %v2709 = vlaneseq
    %v2710 = vshrl.u32 %v2709, 7
    %v2711 = vsub.s32 0, %v2710
    %v2712 = vrot.slane %v2707, %v2711
    %v2778 = vunpack.c.l.b16 %v2643
    %v2779 = vunpack.c.l.b16 %v2644
    %v2780 = vunpack.c.l.b16 %v2645
    %v2781 = vunpack.c.l.b16 %v2646
    %v2782 = vunpack.c.l.b16 %v2647
    %v2783 = vunpack.c.l.b16 %v2648
    %v2784 = vunpack.c.l.b16 %v2649
    %v2785 = vunpack.c.l.b16 %v2650
    %v2786 = vunpack.c.l.b16 %v2651
    %v2787 = vunpack.c.l.b16 %v2652
    %v2788 = vunpack.c.l.b16 %v2653
    %v2789 = vunpack.c.l.b16 %v2654
    %v2790 = vunpack.c.l.b16 %v2655
    %v2791 = vunpack.c.l.b16 %v2656
    %v2792 = vunpack.c.l.b16 %v2657
    %v2793 = vunpack.c.l.b16 %v2658
    %v2794 = vunpack.c.l.b16 %v2659
    %v2795 = vunpack.c.l.b16 %v2660
    %v2796 = vunpack.c.l.b16 %v2661
    %v2797 = vunpack.c.l.b16 %v2662
    %v2798 = vunpack.c.l.b16 %v2663
    %v2799 = vunpack.c.l.b16 %v2664
    %v2800 = vunpack.c.l.b16 %v2665
    %v2801 = vunpack.c.l.b16 %v2666
    %v2802 = vunpack.c.l.b16 %v2667
    %v2803 = vunpack.c.l.b16 %v2668
    %v2804 = vunpack.c.l.b16 %v2669
    %v2805 = vunpack.c.l.b16 %v2670
    %v2806 = vunpack.c.l.b16 %v2671
    %v2807 = vunpack.c.l.b16 %v2672
    %v2808 = vunpack.c.l.b16 %v2673
    %v2809 = vunpack.c.l.b16 %v2674
    %v2810 = vunpack.c.l.b16 %v2675
    %v2811 = vunpack.c.l.b16 %v2676
    %v2812 = vunpack.c.l.b16 %v2677
    %v2813 = vunpack.c.l.b16 %v2678
    %v2814 = vunpack.c.l.b16 %v2679
    %v2815 = vunpack.c.l.b16 %v2680
    %v2816 = vunpack.c.l.b16 %v2681
    %v2817 = vunpack.c.l.b16 %v2682
    %v2818 = vunpack.c.l.b16 %v2683
    %v2819 = vunpack.c.l.b16 %v2684
    %v2820 = vunpack.c.l.b16 %v2685
    %v2821 = vunpack.c.l.b16 %v2686
    %v2822 = vunpack.c.l.b16 %v2687
    %v2823 = vunpack.c.l.b16 %v2688
    %v2824 = vunpack.c.l.b16 %v2689
    %v2825 = vunpack.c.l.b16 %v2690
    %v2826 = vunpack.c.l.b16 %v2691
    %v2827 = vunpack.c.l.b16 %v2692
    %v2828 = vunpack.c.l.b16 %v2693
    %v2829 = vunpack.c.l.b16 %v2694
    %v2830 = vunpack.c.l.b16 %v2695
    %v2831 = vunpack.c.l.b16 %v2696
    %v2832 = vunpack.c.l.b16 %v2697
    %v2833 = vunpack.c.l.b16 %v2698
    %v2834 = vunpack.c.l.b16 %v2699
    %v2835 = vunpack.c.l.b16 %v2700
    %v2836 = vunpack.c.l.b16 %v2701
    %v2837 = vunpack.c.l.b16 %v2702
    %v2838 = vunpack.c.l.b16 %v2703
    %v2839 = vunpack.c.l.b16 %v2704
    %v2840 = vunpack.c.l.b16 %v2705
    %v2841 = vunpack.c.l.b16 %v2706
    %v2842 = vpack.c.b16 %v2779, %v2778
    %v2843 = vpack.c.b16 %v2781, %v2780
    %v2844 = vpack.c.b16 %v2783, %v2782
    %v2845 = vpack.c.b16 %v2785, %v2784
    %v2846 = vpack.c.b16 %v2787, %v2786
    %v2847 = vpack.c.b16 %v2789, %v2788
    %v2848 = vpack.c.b16 %v2791, %v2790
    %v2849 = vpack.c.b16 %v2793, %v2792
    %v2850 = vpack.c.b16 %v2795, %v2794
    %v2851 = vpack.c.b16 %v2797, %v2796
    %v2852 = vpack.c.b16 %v2799, %v2798
    %v2853 = vpack.c.b16 %v2801, %v2800
    %v2854 = vpack.c.b16 %v2803, %v2802
    %v2855 = vpack.c.b16 %v2805, %v2804
    %v2856 = vpack.c.b16 %v2807, %v2806
    %v2857 = vpack.c.b16 %v2809, %v2808
    %v2858 = vpack.c.b16 %v2811, %v2810
    %v2859 = vpack.c.b16 %v2813, %v2812
    %v2860 = vpack.c.b16 %v2815, %v2814
    %v2861 = vpack.c.b16 %v2817, %v2816
    %v2862 = vpack.c.b16 %v2819, %v2818
    %v2863 = vpack.c.b16 %v2821, %v2820
    %v2864 = vpack.c.b16 %v2823, %v2822
    %v2865 = vpack.c.b16 %v2825, %v2824
    %v2866 = vpack.c.b16 %v2827, %v2826
    %v2867 = vpack.c.b16 %v2829, %v2828
    %v2868 = vpack.c.b16 %v2831, %v2830
    %v2869 = vpack.c.b16 %v2833, %v2832
    %v2870 = vpack.c.b16 %v2835, %v2834
    %v2871 = vpack.c.b16 %v2837, %v2836
    %v2872 = vpack.c.b16 %v2839, %v2838
    %v2873 = vpack.c.b16 %v2841, %v2840
    %2906 = vmatprep.subr.bf16.mxu0 0
    %2907 = vmatpush1.bf16.msra.mxu0 %v2849
    %2908 = vmatprep.subr.bf16.mxu0 0
    %2909 = vmatpush1.bf16.msra.mxu0 %v2848
    %2910 = vmatprep.subr.bf16.mxu0 0
    %2911 = vmatpush1.bf16.msra.mxu0 %v2847
    %2912 = vmatprep.subr.bf16.mxu0 0
    %2913 = vmatpush1.bf16.msra.mxu0 %v2846
    %2914 = vmatprep.subr.bf16.mxu0 0
    %2915 = vmatpush1.bf16.msra.mxu0 %v2845
    %2916 = vmatprep.subr.bf16.mxu0 0
    %2917 = vmatpush1.bf16.msra.mxu0 %v2844
    %2918 = vmatprep.subr.bf16.mxu0 0
    %2919 = vmatpush1.bf16.msra.mxu0 %v2843
    %2920 = vmatprep.subr.bf16.mxu0 0
    %2921 = vmatpush1.bf16.msra.mxu0 %v2842
    %2922 = vmatprep.subr.bf16.mxu0 0
    %2923 = vmatpush2.bf16.msra.mxu0 %v2857
    %2924 = vmatprep.subr.bf16.mxu0 0
    %2925 = vmatpush2.bf16.msra.mxu0 %v2856
    %2926 = vmatprep.subr.bf16.mxu0 0
    %2927 = vmatpush2.bf16.msra.mxu0 %v2855
    %2928 = vmatprep.subr.bf16.mxu0 0
    %2929 = vmatpush2.bf16.msra.mxu0 %v2854
    %2930 = vmatprep.subr.bf16.mxu0 0
    %2931 = vmatpush2.bf16.msra.mxu0 %v2853
    %2932 = vmatprep.subr.bf16.mxu0 0
    %2933 = vmatpush2.bf16.msra.mxu0 %v2852
    %2934 = vmatprep.subr.bf16.mxu0 0
    %2935 = vmatpush2.bf16.msra.mxu0 %v2851
    %2936 = vmatprep.subr.bf16.mxu0 0
    %2937 = vmatpush2.bf16.msra.mxu0 %v2850
    %2938 = vmatprep.mubr.bf16.mxu0 %v2640
    %2939 = vmatmul.mubr.bf16.gmra.mxu0 %v2639
    %v2940 = vpop.f32.mrf.mxu0
    %v2941 = vadd.f32 %v2712, %v2940
    %v2942 = vpop.f32.mrf.mxu0
    %v2943 = vpop.f32.mrf.mxu0
    %v2944 = vadd.f32 %v2712, %v2943
    %v2945 = vpop.f32.mrf.mxu0
    %2946 = vdwg.mxu0
    %2947 = vmatprep.subr.bf16.mxu0 0
    %2948 = vmatpush1.bf16.msra.mxu0 %v2865
    %2949 = vmatprep.subr.bf16.mxu0 0
    %2950 = vmatpush1.bf16.msra.mxu0 %v2864
    %2951 = vmatprep.subr.bf16.mxu0 0
    %2952 = vmatpush1.bf16.msra.mxu0 %v2863
    %2953 = vmatprep.subr.bf16.mxu0 0
    %2954 = vmatpush1.bf16.msra.mxu0 %v2862
    %2955 = vmatprep.subr.bf16.mxu0 0
    %2956 = vmatpush1.bf16.msra.mxu0 %v2861
    %2957 = vmatprep.subr.bf16.mxu0 0
    %2958 = vmatpush1.bf16.msra.mxu0 %v2860
    %2959 = vmatprep.subr.bf16.mxu0 0
    %2960 = vmatpush1.bf16.msra.mxu0 %v2859
    %2961 = vmatprep.subr.bf16.mxu0 0
    %2962 = vmatpush1.bf16.msra.mxu0 %v2858
    %2963 = vmatprep.subr.bf16.mxu0 0
    %2964 = vmatpush2.bf16.msra.mxu0 %v2873
    %2965 = vmatprep.subr.bf16.mxu0 0
    %2966 = vmatpush2.bf16.msra.mxu0 %v2872
    %2967 = vmatprep.subr.bf16.mxu0 0
    %2968 = vmatpush2.bf16.msra.mxu0 %v2871
    %2969 = vmatprep.subr.bf16.mxu0 0
    %2970 = vmatpush2.bf16.msra.mxu0 %v2870
    %2971 = vmatprep.subr.bf16.mxu0 0
    %2972 = vmatpush2.bf16.msra.mxu0 %v2869
    %2973 = vmatprep.subr.bf16.mxu0 0
    %2974 = vmatpush2.bf16.msra.mxu0 %v2868
    %2975 = vmatprep.subr.bf16.mxu0 0
    %2976 = vmatpush2.bf16.msra.mxu0 %v2867
    %2977 = vmatprep.subr.bf16.mxu0 0
    %2978 = vmatpush2.bf16.msra.mxu0 %v2866
    %2979 = vmatprep.mubr.bf16.mxu0 %v2642
    %2980 = vmatmul.mubr.bf16.gmra.mxu0 %v2641
    %v2981 = vpop.f32.mrf.mxu0
    %v2982 = vadd.f32 %v2941, %v2981
    %v2983 = vpop.f32.mrf.mxu0
    %v2984 = vpop.f32.mrf.mxu0
    %v2985 = vadd.f32 %v2944, %v2984
    %v2986 = vpop.f32.mrf.mxu0
    %2987 = vdwg.mxu0
    %2988 = vst [vmem:[%s7] sm:$0xff] %v2982
    %2989 = vst [vmem:[%s7 + $0x8] sm:$0xff] %v2985
    // Predicated region
    $region42: #{mymodel_forward.1} parent=1 // pred_check
      _
    $region43: #{mymodel_forward.1} parent=1 // pred_check_branch
      %2991 = sbr.rel (0) target = $region45
    $region44: #{mymodel_forward.1} parent=1 // pred_region
      _
    $region45: #{mymodel_forward.1} parent=1 // pred_fallthru
      _
    // Predicated region
    $region46: #{mymodel_forward.1} parent=1 // pred_check
      _
    $region47: #{mymodel_forward.1} parent=1 // pred_check_branch
      %2993 = sbr.rel (0) target = $region49
    $region48: #{mymodel_forward.1} parent=1 // pred_region
      _
    $region49: #{mymodel_forward.1} parent=1 // pred_fallthru
      _
    %2994 = vsyncpa [#allocation3], 1
    %2995 = vsyncpa [#allocation5], 1

</llo_original>
